<compile_context>
chip_gen: v7x
topology: tpu7x:2x2x1
jax: 0.10.0
libtpu: 0.0.40
codegen_flags: <defaults>
</compile_context>

<pallas_src>
import jax
import jax.numpy as jnp
from jax.experimental import pallas as pl


# ---------------------------------------------------------------------------
# Shared numeric helpers (same policy in kernel and reference): bf16 MXU
# operands, f32 accumulation.
# ---------------------------------------------------------------------------
def _relu(x):
    return jnp.maximum(x, 0.0)


def _mm(x, w):
    return jnp.dot(x.astype(jnp.bfloat16), w.astype(jnp.bfloat16),
                   preferred_element_type=jnp.float32)


# ---------------------------------------------------------------------------
# Fused kernel: enc_u + enc_social + enc_i + prediction MLP.
# ---------------------------------------------------------------------------
def _make_fused_kernel(B, Hu, Hi, S, D):

    def ui_agg(h, rep, w_ref, bv, H):
        # h: (B*H, 2D) bf16 = [e_ui | e_r]; rep: (B, D) f32
        # w_ref slab rows: [w_r1 (2D); w_r2 (D); att1 (2D); att2 (D); linear1 (2D)]
        # bv rows: [b_r1, b_r2, att1.b, att2.b, linear1.b, att3.w^T]
        M = B * H
        br1, br2, a1b, a2b, lb, a3w = (bv[i:i + 1] for i in range(6))
        x = _relu(_mm(h, w_ref[0:2 * D, :]) + br1)                      # (M, D)
        o = _relu(_mm(x, w_ref[2 * D:3 * D, :]) + br2)                  # (M, D)
        rep_b = jnp.broadcast_to(rep[:, None, :], (B, H, D)).reshape(M, D)
        a = _relu(_mm(jnp.concatenate([o, rep_b], axis=-1),
                      w_ref[3 * D:5 * D, :]) + a1b)
        a = _relu(_mm(a, w_ref[5 * D:6 * D, :]) + a2b)
        # att3 (D -> 1) on the VPU; att3 bias dropped (softmax-invariant shift).
        logits = jnp.sum(a * a3w, axis=-1, keepdims=True).reshape(B, H, 1)
        m = jnp.max(logits, axis=1, keepdims=True)
        e = jnp.exp(logits - m)
        att = e * pl.reciprocal(jnp.sum(e, axis=1, keepdims=True), approx=True)
        neigh = jnp.sum(o.reshape(B, H, D) * att, axis=1)               # (B, D)
        return _relu(_mm(jnp.concatenate([rep, neigh], axis=-1),
                         w_ref[6 * D:8 * D, :]) + lb)                   # (B, D)

    def soc_agg(e_u, rep, w_ref, bv):
        # e_u: (B*S, D) bf16; w_ref rows: [att1 (2D); att2 (D); linear1 (2D)]
        # bv rows: [att1.b, att2.b, linear1.b, att3.w^T]
        M = B * S
        a1b, a2b, lb, a3w = (bv[i:i + 1] for i in range(4))
        o = e_u.astype(jnp.float32)                                     # (M, D)
        rep_b = jnp.broadcast_to(rep[:, None, :], (B, S, D)).reshape(M, D)
        a = _relu(_mm(jnp.concatenate([o, rep_b], axis=-1),
                      w_ref[0:2 * D, :]) + a1b)
        a = _relu(_mm(a, w_ref[2 * D:3 * D, :]) + a2b)
        logits = jnp.sum(a * a3w, axis=-1, keepdims=True).reshape(B, S, 1)
        m = jnp.max(logits, axis=1, keepdims=True)
        e = jnp.exp(logits - m)
        att = e * pl.reciprocal(jnp.sum(e, axis=1, keepdims=True), approx=True)
        neigh = jnp.sum(o.reshape(B, S, D) * att, axis=1)
        return _relu(_mm(jnp.concatenate([rep, neigh], axis=-1),
                         w_ref[3 * D:5 * D, :]) + lb)

    def kernel(hu_ref, urep_ref, esoc_ref, hi_ref, irep_ref,
               wenc_u_ref, benc_u_ref, wenc_i_ref, benc_i_ref,
               wsoc_ref, bsoc_ref, wtop_ref, btop_ref, w2_ref, t16_ref,
               out_ref):
        u_rep = urep_ref[...].astype(jnp.float32)
        i_rep = irep_ref[...].astype(jnp.float32)

        item_space = ui_agg(hu_ref[...], u_rep, wenc_u_ref, benc_u_ref[...], Hu)
        social_space = soc_agg(esoc_ref[...], u_rep, wsoc_ref, bsoc_ref[...])
        item_latent = ui_agg(hi_ref[...], i_rep, wenc_i_ref, benc_i_ref[...], Hi)

        # ---- top prediction MLP (BatchNorm folded to scale/shift) ----
        bt = btop_ref[...]
        (b_u, bur1, bur2, bir1, bir2, bui1,
         bn1s, bn1b, bn2s, bn2b, bn3s, bn3b) = (bt[i:i + 1] for i in range(12))
        t16 = t16_ref[...]
        bui2, bn4s, bn4b, w3 = (t16[i:i + 1] for i in range(4))
        bui3 = t16[4:5, 0:1]

        u = _relu(_mm(jnp.concatenate([item_space, social_space], axis=-1),
                      wtop_ref[0:2 * D, :]) + b_u)
        u = _relu((_mm(u, wtop_ref[2 * D:3 * D, :]) + bur1) * bn1s + bn1b)
        u = _mm(u, wtop_ref[3 * D:4 * D, :]) + bur2
        il = _relu((_mm(item_latent, wtop_ref[4 * D:5 * D, :]) + bir1) * bn2s + bn2b)
        il = _mm(il, wtop_ref[5 * D:6 * D, :]) + bir2
        x = _relu((_mm(jnp.concatenate([u, il], axis=-1),
                       wtop_ref[6 * D:8 * D, :]) + bui1) * bn3s + bn3b)
        x = _relu((_mm(x, w2_ref[...]) + bui2) * bn4s + bn4b)           # (B, 16)
        # w_ui3 (16 -> 1) on the VPU; broadcast scores across 128 lanes so the
        # single output store is unmasked / lane-dense.
        score = jnp.sum(x * w3, axis=-1, keepdims=True) + bui3          # (B, 1)
        out_ref[...] = jnp.broadcast_to(score, (B, 128))

    return kernel


# ---------------------------------------------------------------------------
# Parameter packing: one bf16 weight slab + one f32 bias/vector slab per block.
# ---------------------------------------------------------------------------
def pack_params(params):
    def pack_ui(p):
        wr1, br1, wr2, br2, a1w, a1b, a2w, a2b, a3w, a3b, lw, lb = p
        w = jnp.concatenate([wr1, wr2, a1w, a2w, lw], axis=0).astype(jnp.bfloat16)
        # att3 bias dropped: adding a constant to every neighbor logit does not
        # change the softmax.
        bv = jnp.concatenate([br1, br2, a1b, a2b, lb, a3w.T], axis=0)   # (6, D)
        return w, bv

    def pack_soc(p):
        a1w, a1b, a2w, a2b, a3w, a3b, lw, lb = p
        w = jnp.concatenate([a1w, a2w, lw], axis=0).astype(jnp.bfloat16)
        bv = jnp.concatenate([a1b, a2b, lb, a3w.T], axis=0)             # (4, D)
        return w, bv

    def pack_top(tp):
        (wu, bu, wur1, bur1, wur2, bur2, wir1, bir1, wir2, bir2,
         wui1, bui1, wui2, bui2, wui3, bui3,
         bn1s, bn1b, bn2s, bn2b, bn3s, bn3b, bn4s, bn4b) = tp
        w = jnp.concatenate([wu, wur1, wur2, wir1, wir2, wui1],
                            axis=0).astype(jnp.bfloat16)                # (8D, D)
        b_d = jnp.concatenate([bu, bur1, bur2, bir1, bir2, bui1,
                               bn1s, bn1b, bn2s, bn2b, bn3s, bn3b],
                              axis=0)                                   # (12, D)
        t16 = jnp.concatenate([bui2, bn4s, bn4b, wui3.T,
                               jnp.broadcast_to(bui3, (1, 16))],
                              axis=0)                                   # (5, 16)
        return w, b_d, wui2.astype(jnp.bfloat16), t16

    w_eu, b_eu = pack_ui(params["enc_u"])
    w_ei, b_ei = pack_ui(params["enc_i"])
    w_s, b_s = pack_soc(params["soc"])
    w_t, b_t, w2, t16 = pack_top(params["top"])
    return (w_eu, b_eu, w_ei, b_ei, w_s, b_s, w_t, b_t, w2, t16)


# ---------------------------------------------------------------------------
# Input preparation (embedding gathers + the [e_ui | e_r] concat are XLA glue).
# TODO(synk): for production batch/history sizes, move the gathers in-kernel via
# PrefetchScalarGridSpec scalar-prefetched index tables to avoid the HBM
# round-trip of the gathered (B, H, D) tensors.
# ---------------------------------------------------------------------------
def prepare_inputs(nodes_u, nodes_i, emb, hist):
    u2e, i2e, r2e = emb
    history_u, history_ur, history_i, history_ir, social = hist
    hu_cat = jnp.concatenate([i2e[history_u[nodes_u]],
                              r2e[history_ur[nodes_u]]], axis=-1)   # (B, Hu, 2D)
    hi_cat = jnp.concatenate([u2e[history_i[nodes_i]],
                              r2e[history_ir[nodes_i]]], axis=-1)   # (B, Hi, 2D)
    e_soc = u2e[social[nodes_u]]                                    # (B, S, D)
    u_rep = u2e[nodes_u]                                            # (B, D)
    i_rep = i2e[nodes_i]                                            # (B, D)
    bf = lambda x: x.astype(jnp.bfloat16)   # MXU operands + half the DMA bytes
    return tuple(map(bf, (hu_cat, u_rep, e_soc, hi_cat, i_rep)))


def model_forward(nodes_u, nodes_i, emb, hist, params):
    hu_cat, u_rep, e_soc, hi_cat, i_rep = prepare_inputs(nodes_u, nodes_i, emb, hist)
    packed = pack_params(params)
    B, Hu, D2 = hu_cat.shape
    Hi, S, D = hi_cat.shape[1], e_soc.shape[1], D2 // 2
    # Whole batch in one invocation (B is small); for large B, tile over node
    # blocks (NB % 8 == 0) with a "parallel" grid axis for v7x's two TensorCores.
    out = pl.pallas_call(
        _make_fused_kernel(B, Hu, Hi, S, D),
        out_shape=jax.ShapeDtypeStruct((B, 128), jnp.float32),
    )(hu_cat.reshape(B * Hu, D2), u_rep, e_soc.reshape(B * S, D),
      hi_cat.reshape(B * Hi, D2), i_rep, *packed)
    return out[:, 0]


# ---------------------------------------------------------------------------
# Parameters (deterministic synthetic init; shapes follow the nn.Module)
# ---------------------------------------------------------------------------
def init_params(key, D):
    keys = iter(jax.random.split(key, 30))

    def lin(fi, fo, scale=0.2):
        kw, kb = jax.random.split(next(keys))
        w = scale * jax.random.normal(kw, (fi, fo), jnp.float32)   # stored (in, out)
        b = scale * jax.random.normal(kb, (1, fo), jnp.float32)
        return w, b

    def ui_agg_params():
        wr1, br1 = lin(2 * D, D)
        wr2, br2 = lin(D, D)
        a1w, a1b = lin(2 * D, D)
        a2w, a2b = lin(D, D)
        a3w, a3b = lin(D, 1)
        lw, lb = lin(2 * D, D)
        # TODO(synk): Attention.bilinear is defined in the module but never used in forward.
        return (wr1, br1, wr2, br2, a1w, a1b, a2w, a2b, a3w, a3b, lw, lb)

    def soc_agg_params():
        a1w, a1b = lin(2 * D, D)
        a2w, a2b = lin(D, D)
        a3w, a3b = lin(D, 1)
        lw, lb = lin(2 * D, D)
        return (a1w, a1b, a2w, a2b, a3w, a3b, lw, lb)

    enc_u = ui_agg_params()
    enc_i = ui_agg_params()
    soc = soc_agg_params()

    wu, bu = lin(2 * D, D)
    wur1, bur1 = lin(D, D)
    wur2, bur2 = lin(D, D)
    wir1, bir1 = lin(D, D)
    wir2, bir2 = lin(D, D)
    wui1, bui1 = lin(2 * D, D)
    wui2, bui2 = lin(D, 16)
    wui3, bui3 = lin(16, 1)

    eps = 1e-5

    def bn(n):  # eval-mode BatchNorm1d folded to per-feature scale/shift
        scale = jnp.full((1, n), 1.0 / jnp.sqrt(1.0 + eps), jnp.float32)
        shift = jnp.zeros((1, n), jnp.float32)
        return scale, shift

    bn1s, bn1b = bn(D)
    bn2s, bn2b = bn(D)
    bn3s, bn3b = bn(D)
    bn4s, bn4b = bn(16)

    top = (wu, bu, wur1, bur1, wur2, bur2, wir1, bir1, wir2, bir2,
           wui1, bui1, wui2, bui2, wui3, bui3,
           bn1s, bn1b, bn2s, bn2b, bn3s, bn3b, bn4s, bn4b)
    return {"enc_u": enc_u, "enc_i": enc_i, "soc": soc, "top": top}


# ---------------------------------------------------------------------------
# Pure-JAX reference (same bf16-operand / f32-accumulate policy as the kernel)
# ---------------------------------------------------------------------------
def _ref_ui(h_cat, rep, p):
    wr1, br1, wr2, br2, a1w, a1b, a2w, a2b, a3w, a3b, lw, lb = p
    h = h_cat.astype(jnp.float32)
    rep = rep.astype(jnp.float32)
    x = _relu(_mm(h, wr1) + br1)
    o = _relu(_mm(x, wr2) + br2)
    a_in = jnp.concatenate([o, jnp.broadcast_to(rep[:, None, :], o.shape)], -1)
    a = _relu(_mm(a_in, a1w) + a1b)
    a = _relu(_mm(a, a2w) + a2b)
    logits = jnp.sum(a * a3w[:, 0], axis=-1, keepdims=True) + a3b
    att = jax.nn.softmax(logits, axis=1)
    neigh = jnp.sum(o * att, axis=1)
    return _relu(_mm(jnp.concatenate([rep, neigh], -1), lw) + lb)


def _ref_social(e_u, rep, p):
    a1w, a1b, a2w, a2b, a3w, a3b, lw, lb = p
    o = e_u.astype(jnp.float32)
    rep = rep.astype(jnp.float32)
    a_in = jnp.concatenate([o, jnp.broadcast_to(rep[:, None, :], o.shape)], -1)
    a = _relu(_mm(a_in, a1w) + a1b)
    a = _relu(_mm(a, a2w) + a2b)
    logits = jnp.sum(a * a3w[:, 0], axis=-1, keepdims=True) + a3b
    att = jax.nn.softmax(logits, axis=1)
    neigh = jnp.sum(o * att, axis=1)
    return _relu(_mm(jnp.concatenate([rep, neigh], -1), lw) + lb)


def _ref_predict(item_space, social_space, item_latent, tp):
    (wu, bu, wur1, bur1, wur2, bur2, wir1, bir1, wir2, bir2,
     wui1, bui1, wui2, bui2, wui3, bui3,
     bn1s, bn1b, bn2s, bn2b, bn3s, bn3b, bn4s, bn4b) = tp
    u = _relu(_mm(jnp.concatenate([item_space, social_space], 1), wu) + bu)
    u = _relu((_mm(u, wur1) + bur1) * bn1s + bn1b)
    u = _mm(u, wur2) + bur2
    il = _relu((_mm(item_latent, wir1) + bir1) * bn2s + bn2b)
    il = _mm(il, wir2) + bir2
    x = _relu((_mm(jnp.concatenate([u, il], 1), wui1) + bui1) * bn3s + bn3b)
    x = _relu((_mm(x, wui2) + bui2) * bn4s + bn4b)
    return (jnp.sum(x * wui3[:, 0], axis=-1, keepdims=True) + bui3)[:, 0]


def ref_forward(nodes_u, nodes_i, emb, hist, params):
    hu_cat, u_rep, e_soc, hi_cat, i_rep = prepare_inputs(nodes_u, nodes_i, emb, hist)
    item_space = _ref_ui(hu_cat, u_rep, params["enc_u"])
    social_space = _ref_social(e_soc, u_rep, params["soc"])
    item_latent = _ref_ui(hi_cat, i_rep, params["enc_i"])
    return _ref_predict(item_space, social_space, item_latent, params["top"])


# ---------------------------------------------------------------------------
if __name__ == "__main__":
    key = jax.random.PRNGKey(0)
    D = 32                      # embed_dim
    num_users, num_items, num_ratings = 16, 12, 5
    Hu, Hi, S = 8, 8, 8         # fixed (padded) history / neighbor lengths
    B = 4                       # batch of user nodes and item nodes

    k_emb, k_par, k_hist = jax.random.split(key, 3)
    ku, ki, kr = jax.random.split(k_emb, 3)
    u2e = jax.random.normal(ku, (num_users, D), jnp.float32)
    i2e = jax.random.normal(ki, (num_items, D), jnp.float32)
    r2e = jax.random.normal(kr, (num_ratings, D), jnp.float32)

    kh = jax.random.split(k_hist, 5)
    history_u = jax.random.randint(kh[0], (num_users, Hu), 0, num_items)
    history_ur = jax.random.randint(kh[1], (num_users, Hu), 0, num_ratings)
    history_i = jax.random.randint(kh[2], (num_items, Hi), 0, num_users)
    history_ir = jax.random.randint(kh[3], (num_items, Hi), 0, num_ratings)
    social_neighbor = jax.random.randint(kh[4], (num_users, S), 0, num_users)

    nodes_u = jnp.array([0, 3, 7, 11], jnp.int32)
    nodes_i = jnp.array([1, 5, 2, 9], jnp.int32)

    params = init_params(k_par, D)
    emb = (u2e, i2e, r2e)
    hist = (history_u, history_ur, history_i, history_ir, social_neighbor)

    fwd = jax.jit(model_forward)
    scores = fwd(nodes_u, nodes_i, emb, hist, params)
    jax.block_until_ready(scores)

    assert scores.shape == (B,), scores.shape
    scores_ref = ref_forward(nodes_u, nodes_i, emb, hist, params)
    assert jnp.allclose(scores, scores_ref, atol=2e-2, rtol=2e-2), (scores, scores_ref)

    print("KERNEL_OK")
</pallas_src>

<mosaic_0001>
module attributes {stable_mosaic.version = 11 : i64} {
  func.func @kernel(%arg0: memref<32x64xbf16, #tpu.memory_space<vmem>>, %arg1: memref<4x32xbf16, #tpu.memory_space<vmem>>, %arg2: memref<32x32xbf16, #tpu.memory_space<vmem>>, %arg3: memref<32x64xbf16, #tpu.memory_space<vmem>>, %arg4: memref<4x32xbf16, #tpu.memory_space<vmem>>, %arg5: memref<256x32xbf16, #tpu.memory_space<vmem>>, %arg6: memref<6x32xf32, #tpu.memory_space<vmem>>, %arg7: memref<256x32xbf16, #tpu.memory_space<vmem>>, %arg8: memref<6x32xf32, #tpu.memory_space<vmem>>, %arg9: memref<160x32xbf16, #tpu.memory_space<vmem>>, %arg10: memref<4x32xf32, #tpu.memory_space<vmem>>, %arg11: memref<256x32xbf16, #tpu.memory_space<vmem>>, %arg12: memref<12x32xf32, #tpu.memory_space<vmem>>, %arg13: memref<32x16xbf16, #tpu.memory_space<vmem>>, %arg14: memref<5x16xf32, #tpu.memory_space<vmem>>, %arg15: memref<4x128xf32, #tpu.memory_space<vmem>>) attributes {dimension_semantics = [], scalar_prefetch = 0 : i64, scratch_operands = 0 : i64, tpu.core_type = #tpu.core_type<tc>} {
    %c0 = arith.constant 0 : index
    %c0_0 = arith.constant 0 : index
    %0 = vector.load %arg1[%c0, %c0_0] : memref<4x32xbf16, #tpu.memory_space<vmem>>, vector<4x32xbf16>
    %1 = arith.extf %0 : vector<4x32xbf16> to vector<4x32xf32>
    %c0_1 = arith.constant 0 : index
    %c0_2 = arith.constant 0 : index
    %2 = vector.load %arg4[%c0_1, %c0_2] : memref<4x32xbf16, #tpu.memory_space<vmem>>, vector<4x32xbf16>
    %3 = arith.extf %2 : vector<4x32xbf16> to vector<4x32xf32>
    %c0_3 = arith.constant 0 : index
    %c0_4 = arith.constant 0 : index
    %4 = vector.load %arg0[%c0_3, %c0_4] : memref<32x64xbf16, #tpu.memory_space<vmem>>, vector<32x64xbf16>
    %c0_5 = arith.constant 0 : index
    %c0_6 = arith.constant 0 : index
    %5 = vector.load %arg6[%c0_5, %c0_6] : memref<6x32xf32, #tpu.memory_space<vmem>>, vector<6x32xf32>
    %6 = vector.extract_strided_slice %5 {offsets = [0, 0], sizes = [1, 32], strides = [1, 1]} : vector<6x32xf32> to vector<1x32xf32>
    %7 = vector.extract_strided_slice %5 {offsets = [1, 0], sizes = [1, 32], strides = [1, 1]} : vector<6x32xf32> to vector<1x32xf32>
    %8 = vector.extract_strided_slice %5 {offsets = [2, 0], sizes = [1, 32], strides = [1, 1]} : vector<6x32xf32> to vector<1x32xf32>
    %9 = vector.extract_strided_slice %5 {offsets = [3, 0], sizes = [1, 32], strides = [1, 1]} : vector<6x32xf32> to vector<1x32xf32>
    %10 = vector.extract_strided_slice %5 {offsets = [4, 0], sizes = [1, 32], strides = [1, 1]} : vector<6x32xf32> to vector<1x32xf32>
    %11 = vector.extract_strided_slice %5 {offsets = [5, 0], sizes = [1, 32], strides = [1, 1]} : vector<6x32xf32> to vector<1x32xf32>
    %c0_7 = arith.constant 0 : index
    %c0_8 = arith.constant 0 : index
    %12 = vector.load %arg5[%c0_7, %c0_8] : memref<256x32xbf16, #tpu.memory_space<vmem>>, vector<64x32xbf16>
    %cst = arith.constant dense<0.000000e+00> : vector<32x32xf32>
    %13 = tpu.matmul %4, %12, %cst {dimension_numbers = #tpu.dot_dimension_numbers<[1], [0], [0], [1], [0, 0, 1, 1], [], []>} : vector<32x64xbf16>, vector<64x32xbf16>, vector<32x32xf32> -> vector<32x32xf32>
    %14 = vector.broadcast %6 : vector<1x32xf32> to vector<32x32xf32>
    %15 = arith.addf %13, %14 : vector<32x32xf32>
    %cst_9 = arith.constant 0.000000e+00 : f32
    %16 = vector.broadcast %cst_9 : f32 to vector<32x32xf32>
    %17 = arith.maximumf %15, %16 : vector<32x32xf32>
    %c64 = arith.constant 64 : index
    %c0_10 = arith.constant 0 : index
    %18 = vector.load %arg5[%c64, %c0_10] : memref<256x32xbf16, #tpu.memory_space<vmem>>, vector<32x32xbf16>
    %19 = arith.truncf %17 : vector<32x32xf32> to vector<32x32xbf16>
    %cst_11 = arith.constant dense<0.000000e+00> : vector<32x32xf32>
    %20 = tpu.matmul %19, %18, %cst_11 {dimension_numbers = #tpu.dot_dimension_numbers<[1], [0], [0], [1], [0, 0, 1, 1], [], []>} : vector<32x32xbf16>, vector<32x32xbf16>, vector<32x32xf32> -> vector<32x32xf32>
    %21 = vector.broadcast %7 : vector<1x32xf32> to vector<32x32xf32>
    %22 = arith.addf %20, %21 : vector<32x32xf32>
    %cst_12 = arith.constant 0.000000e+00 : f32
    %23 = vector.broadcast %cst_12 : f32 to vector<32x32xf32>
    %24 = arith.maximumf %22, %23 : vector<32x32xf32>
    %25 = vector.shape_cast %1 : vector<4x32xf32> to vector<4x1x32xf32>
    %26 = vector.shape_cast %25 : vector<4x1x32xf32> to vector<4x1x32xf32>
    %27 = vector.broadcast %26 : vector<4x1x32xf32> to vector<4x8x32xf32>
    %28 = vector.shape_cast %27 : vector<4x8x32xf32> to vector<32x32xf32>
    %29 = tpu.concatenate %24, %28 in 1 : vector<32x32xf32>, vector<32x32xf32> -> vector<32x64xf32>
    %c96 = arith.constant 96 : index
    %c0_13 = arith.constant 0 : index
    %30 = vector.load %arg5[%c96, %c0_13] : memref<256x32xbf16, #tpu.memory_space<vmem>>, vector<64x32xbf16>
    %31 = arith.truncf %29 : vector<32x64xf32> to vector<32x64xbf16>
    %cst_14 = arith.constant dense<0.000000e+00> : vector<32x32xf32>
    %32 = tpu.matmul %31, %30, %cst_14 {dimension_numbers = #tpu.dot_dimension_numbers<[1], [0], [0], [1], [0, 0, 1, 1], [], []>} : vector<32x64xbf16>, vector<64x32xbf16>, vector<32x32xf32> -> vector<32x32xf32>
    %33 = vector.broadcast %8 : vector<1x32xf32> to vector<32x32xf32>
    %34 = arith.addf %32, %33 : vector<32x32xf32>
    %cst_15 = arith.constant 0.000000e+00 : f32
    %35 = vector.broadcast %cst_15 : f32 to vector<32x32xf32>
    %36 = arith.maximumf %34, %35 : vector<32x32xf32>
    %c160 = arith.constant 160 : index
    %c0_16 = arith.constant 0 : index
    %37 = vector.load %arg5[%c160, %c0_16] : memref<256x32xbf16, #tpu.memory_space<vmem>>, vector<32x32xbf16>
    %38 = arith.truncf %36 : vector<32x32xf32> to vector<32x32xbf16>
    %cst_17 = arith.constant dense<0.000000e+00> : vector<32x32xf32>
    %39 = tpu.matmul %38, %37, %cst_17 {dimension_numbers = #tpu.dot_dimension_numbers<[1], [0], [0], [1], [0, 0, 1, 1], [], []>} : vector<32x32xbf16>, vector<32x32xbf16>, vector<32x32xf32> -> vector<32x32xf32>
    %40 = vector.broadcast %9 : vector<1x32xf32> to vector<32x32xf32>
    %41 = arith.addf %39, %40 : vector<32x32xf32>
    %cst_18 = arith.constant 0.000000e+00 : f32
    %42 = vector.broadcast %cst_18 : f32 to vector<32x32xf32>
    %43 = arith.maximumf %41, %42 : vector<32x32xf32>
    %44 = vector.broadcast %11 : vector<1x32xf32> to vector<32x32xf32>
    %45 = arith.mulf %43, %44 : vector<32x32xf32>
    %cst_19 = arith.constant dense<0.000000e+00> : vector<32xf32>
    %46 = vector.multi_reduction <add>, %45, %cst_19 [1] : vector<32x32xf32> to vector<32xf32>
    %47 = vector.shape_cast %46 : vector<32xf32> to vector<32x1xf32>
    %48 = vector.shape_cast %47 : vector<32x1xf32> to vector<4x8x1xf32>
    %cst_20 = arith.constant dense<0xFF800000> : vector<4x1xf32>
    %49 = vector.multi_reduction <maximumf>, %48, %cst_20 [1] : vector<4x8x1xf32> to vector<4x1xf32>
    %50 = vector.shape_cast %49 : vector<4x1xf32> to vector<4x1x1xf32>
    %51 = vector.broadcast %50 : vector<4x1x1xf32> to vector<4x8x1xf32>
    %52 = arith.subf %48, %51 : vector<4x8x1xf32>
    %53 = math.exp %52 : vector<4x8x1xf32>
    %cst_21 = arith.constant dense<0.000000e+00> : vector<4x1xf32>
    %54 = vector.multi_reduction <add>, %53, %cst_21 [1] : vector<4x8x1xf32> to vector<4x1xf32>
    %55 = vector.shape_cast %54 : vector<4x1xf32> to vector<4x1x1xf32>
    %56 = tpu.reciprocal %55 {approx = true} : vector<4x1x1xf32> -> vector<4x1x1xf32>
    %57 = vector.broadcast %56 : vector<4x1x1xf32> to vector<4x8x1xf32>
    %58 = arith.mulf %53, %57 : vector<4x8x1xf32>
    %59 = vector.shape_cast %24 : vector<32x32xf32> to vector<4x8x32xf32>
    %60 = vector.broadcast %58 : vector<4x8x1xf32> to vector<4x8x32xf32>
    %61 = arith.mulf %59, %60 : vector<4x8x32xf32>
    %cst_22 = arith.constant dense<0.000000e+00> : vector<4x32xf32>
    %62 = vector.multi_reduction <add>, %61, %cst_22 [1] : vector<4x8x32xf32> to vector<4x32xf32>
    %63 = tpu.concatenate %1, %62 in 1 : vector<4x32xf32>, vector<4x32xf32> -> vector<4x64xf32>
    %c192 = arith.constant 192 : index
    %c0_23 = arith.constant 0 : index
    %64 = vector.load %arg5[%c192, %c0_23] : memref<256x32xbf16, #tpu.memory_space<vmem>>, vector<64x32xbf16>
    %65 = arith.truncf %63 : vector<4x64xf32> to vector<4x64xbf16>
    %cst_24 = arith.constant dense<0.000000e+00> : vector<4x32xf32>
    %66 = tpu.matmul %65, %64, %cst_24 {dimension_numbers = #tpu.dot_dimension_numbers<[1], [0], [0], [1], [0, 0, 1, 1], [], []>} : vector<4x64xbf16>, vector<64x32xbf16>, vector<4x32xf32> -> vector<4x32xf32>
    %67 = vector.broadcast %10 : vector<1x32xf32> to vector<4x32xf32>
    %68 = arith.addf %66, %67 : vector<4x32xf32>
    %cst_25 = arith.constant 0.000000e+00 : f32
    %69 = vector.broadcast %cst_25 : f32 to vector<4x32xf32>
    %70 = arith.maximumf %68, %69 : vector<4x32xf32>
    %c0_26 = arith.constant 0 : index
    %c0_27 = arith.constant 0 : index
    %71 = vector.load %arg2[%c0_26, %c0_27] : memref<32x32xbf16, #tpu.memory_space<vmem>>, vector<32x32xbf16>
    %c0_28 = arith.constant 0 : index
    %c0_29 = arith.constant 0 : index
    %72 = vector.load %arg10[%c0_28, %c0_29] : memref<4x32xf32, #tpu.memory_space<vmem>>, vector<4x32xf32>
    %73 = vector.extract_strided_slice %72 {offsets = [0, 0], sizes = [1, 32], strides = [1, 1]} : vector<4x32xf32> to vector<1x32xf32>
    %74 = vector.extract_strided_slice %72 {offsets = [1, 0], sizes = [1, 32], strides = [1, 1]} : vector<4x32xf32> to vector<1x32xf32>
    %75 = vector.extract_strided_slice %72 {offsets = [2, 0], sizes = [1, 32], strides = [1, 1]} : vector<4x32xf32> to vector<1x32xf32>
    %76 = vector.extract_strided_slice %72 {offsets = [3, 0], sizes = [1, 32], strides = [1, 1]} : vector<4x32xf32> to vector<1x32xf32>
    %77 = arith.extf %71 : vector<32x32xbf16> to vector<32x32xf32>
    %78 = vector.shape_cast %1 : vector<4x32xf32> to vector<4x1x32xf32>
    %79 = vector.shape_cast %78 : vector<4x1x32xf32> to vector<4x1x32xf32>
    %80 = vector.broadcast %79 : vector<4x1x32xf32> to vector<4x8x32xf32>
    %81 = vector.shape_cast %80 : vector<4x8x32xf32> to vector<32x32xf32>
    %82 = tpu.concatenate %77, %81 in 1 : vector<32x32xf32>, vector<32x32xf32> -> vector<32x64xf32>
    %c0_30 = arith.constant 0 : index
    %c0_31 = arith.constant 0 : index
    %83 = vector.load %arg9[%c0_30, %c0_31] : memref<160x32xbf16, #tpu.memory_space<vmem>>, vector<64x32xbf16>
    %84 = arith.truncf %82 : vector<32x64xf32> to vector<32x64xbf16>
    %cst_32 = arith.constant dense<0.000000e+00> : vector<32x32xf32>
    %85 = tpu.matmul %84, %83, %cst_32 {dimension_numbers = #tpu.dot_dimension_numbers<[1], [0], [0], [1], [0, 0, 1, 1], [], []>} : vector<32x64xbf16>, vector<64x32xbf16>, vector<32x32xf32> -> vector<32x32xf32>
    %86 = vector.broadcast %73 : vector<1x32xf32> to vector<32x32xf32>
    %87 = arith.addf %85, %86 : vector<32x32xf32>
    %cst_33 = arith.constant 0.000000e+00 : f32
    %88 = vector.broadcast %cst_33 : f32 to vector<32x32xf32>
    %89 = arith.maximumf %87, %88 : vector<32x32xf32>
    %c64_34 = arith.constant 64 : index
    %c0_35 = arith.constant 0 : index
    %90 = vector.load %arg9[%c64_34, %c0_35] : memref<160x32xbf16, #tpu.memory_space<vmem>>, vector<32x32xbf16>
    %91 = arith.truncf %89 : vector<32x32xf32> to vector<32x32xbf16>
    %cst_36 = arith.constant dense<0.000000e+00> : vector<32x32xf32>
    %92 = tpu.matmul %91, %90, %cst_36 {dimension_numbers = #tpu.dot_dimension_numbers<[1], [0], [0], [1], [0, 0, 1, 1], [], []>} : vector<32x32xbf16>, vector<32x32xbf16>, vector<32x32xf32> -> vector<32x32xf32>
    %93 = vector.broadcast %74 : vector<1x32xf32> to vector<32x32xf32>
    %94 = arith.addf %92, %93 : vector<32x32xf32>
    %cst_37 = arith.constant 0.000000e+00 : f32
    %95 = vector.broadcast %cst_37 : f32 to vector<32x32xf32>
    %96 = arith.maximumf %94, %95 : vector<32x32xf32>
    %97 = vector.broadcast %76 : vector<1x32xf32> to vector<32x32xf32>
    %98 = arith.mulf %96, %97 : vector<32x32xf32>
    %cst_38 = arith.constant dense<0.000000e+00> : vector<32xf32>
    %99 = vector.multi_reduction <add>, %98, %cst_38 [1] : vector<32x32xf32> to vector<32xf32>
    %100 = vector.shape_cast %99 : vector<32xf32> to vector<32x1xf32>
    %101 = vector.shape_cast %100 : vector<32x1xf32> to vector<4x8x1xf32>
    %cst_39 = arith.constant dense<0xFF800000> : vector<4x1xf32>
    %102 = vector.multi_reduction <maximumf>, %101, %cst_39 [1] : vector<4x8x1xf32> to vector<4x1xf32>
    %103 = vector.shape_cast %102 : vector<4x1xf32> to vector<4x1x1xf32>
    %104 = vector.broadcast %103 : vector<4x1x1xf32> to vector<4x8x1xf32>
    %105 = arith.subf %101, %104 : vector<4x8x1xf32>
    %106 = math.exp %105 : vector<4x8x1xf32>
    %cst_40 = arith.constant dense<0.000000e+00> : vector<4x1xf32>
    %107 = vector.multi_reduction <add>, %106, %cst_40 [1] : vector<4x8x1xf32> to vector<4x1xf32>
    %108 = vector.shape_cast %107 : vector<4x1xf32> to vector<4x1x1xf32>
    %109 = tpu.reciprocal %108 {approx = true} : vector<4x1x1xf32> -> vector<4x1x1xf32>
    %110 = vector.broadcast %109 : vector<4x1x1xf32> to vector<4x8x1xf32>
    %111 = arith.mulf %106, %110 : vector<4x8x1xf32>
    %112 = vector.shape_cast %77 : vector<32x32xf32> to vector<4x8x32xf32>
    %113 = vector.broadcast %111 : vector<4x8x1xf32> to vector<4x8x32xf32>
    %114 = arith.mulf %112, %113 : vector<4x8x32xf32>
    %cst_41 = arith.constant dense<0.000000e+00> : vector<4x32xf32>
    %115 = vector.multi_reduction <add>, %114, %cst_41 [1] : vector<4x8x32xf32> to vector<4x32xf32>
    %116 = tpu.concatenate %1, %115 in 1 : vector<4x32xf32>, vector<4x32xf32> -> vector<4x64xf32>
    %c96_42 = arith.constant 96 : index
    %c0_43 = arith.constant 0 : index
    %117 = vector.load %arg9[%c96_42, %c0_43] : memref<160x32xbf16, #tpu.memory_space<vmem>>, vector<64x32xbf16>
    %118 = arith.truncf %116 : vector<4x64xf32> to vector<4x64xbf16>
    %cst_44 = arith.constant dense<0.000000e+00> : vector<4x32xf32>
    %119 = tpu.matmul %118, %117, %cst_44 {dimension_numbers = #tpu.dot_dimension_numbers<[1], [0], [0], [1], [0, 0, 1, 1], [], []>} : vector<4x64xbf16>, vector<64x32xbf16>, vector<4x32xf32> -> vector<4x32xf32>
    %120 = vector.broadcast %75 : vector<1x32xf32> to vector<4x32xf32>
    %121 = arith.addf %119, %120 : vector<4x32xf32>
    %cst_45 = arith.constant 0.000000e+00 : f32
    %122 = vector.broadcast %cst_45 : f32 to vector<4x32xf32>
    %123 = arith.maximumf %121, %122 : vector<4x32xf32>
    %c0_46 = arith.constant 0 : index
    %c0_47 = arith.constant 0 : index
    %124 = vector.load %arg3[%c0_46, %c0_47] : memref<32x64xbf16, #tpu.memory_space<vmem>>, vector<32x64xbf16>
    %c0_48 = arith.constant 0 : index
    %c0_49 = arith.constant 0 : index
    %125 = vector.load %arg8[%c0_48, %c0_49] : memref<6x32xf32, #tpu.memory_space<vmem>>, vector<6x32xf32>
    %126 = vector.extract_strided_slice %125 {offsets = [0, 0], sizes = [1, 32], strides = [1, 1]} : vector<6x32xf32> to vector<1x32xf32>
    %127 = vector.extract_strided_slice %125 {offsets = [1, 0], sizes = [1, 32], strides = [1, 1]} : vector<6x32xf32> to vector<1x32xf32>
    %128 = vector.extract_strided_slice %125 {offsets = [2, 0], sizes = [1, 32], strides = [1, 1]} : vector<6x32xf32> to vector<1x32xf32>
    %129 = vector.extract_strided_slice %125 {offsets = [3, 0], sizes = [1, 32], strides = [1, 1]} : vector<6x32xf32> to vector<1x32xf32>
    %130 = vector.extract_strided_slice %125 {offsets = [4, 0], sizes = [1, 32], strides = [1, 1]} : vector<6x32xf32> to vector<1x32xf32>
    %131 = vector.extract_strided_slice %125 {offsets = [5, 0], sizes = [1, 32], strides = [1, 1]} : vector<6x32xf32> to vector<1x32xf32>
    %c0_50 = arith.constant 0 : index
    %c0_51 = arith.constant 0 : index
    %132 = vector.load %arg7[%c0_50, %c0_51] : memref<256x32xbf16, #tpu.memory_space<vmem>>, vector<64x32xbf16>
    %cst_52 = arith.constant dense<0.000000e+00> : vector<32x32xf32>
    %133 = tpu.matmul %124, %132, %cst_52 {dimension_numbers = #tpu.dot_dimension_numbers<[1], [0], [0], [1], [0, 0, 1, 1], [], []>} : vector<32x64xbf16>, vector<64x32xbf16>, vector<32x32xf32> -> vector<32x32xf32>
    %134 = vector.broadcast %126 : vector<1x32xf32> to vector<32x32xf32>
    %135 = arith.addf %133, %134 : vector<32x32xf32>
    %cst_53 = arith.constant 0.000000e+00 : f32
    %136 = vector.broadcast %cst_53 : f32 to vector<32x32xf32>
    %137 = arith.maximumf %135, %136 : vector<32x32xf32>
    %c64_54 = arith.constant 64 : index
    %c0_55 = arith.constant 0 : index
    %138 = vector.load %arg7[%c64_54, %c0_55] : memref<256x32xbf16, #tpu.memory_space<vmem>>, vector<32x32xbf16>
    %139 = arith.truncf %137 : vector<32x32xf32> to vector<32x32xbf16>
    %cst_56 = arith.constant dense<0.000000e+00> : vector<32x32xf32>
    %140 = tpu.matmul %139, %138, %cst_56 {dimension_numbers = #tpu.dot_dimension_numbers<[1], [0], [0], [1], [0, 0, 1, 1], [], []>} : vector<32x32xbf16>, vector<32x32xbf16>, vector<32x32xf32> -> vector<32x32xf32>
    %141 = vector.broadcast %127 : vector<1x32xf32> to vector<32x32xf32>
    %142 = arith.addf %140, %141 : vector<32x32xf32>
    %cst_57 = arith.constant 0.000000e+00 : f32
    %143 = vector.broadcast %cst_57 : f32 to vector<32x32xf32>
    %144 = arith.maximumf %142, %143 : vector<32x32xf32>
    %145 = vector.shape_cast %3 : vector<4x32xf32> to vector<4x1x32xf32>
    %146 = vector.shape_cast %145 : vector<4x1x32xf32> to vector<4x1x32xf32>
    %147 = vector.broadcast %146 : vector<4x1x32xf32> to vector<4x8x32xf32>
    %148 = vector.shape_cast %147 : vector<4x8x32xf32> to vector<32x32xf32>
    %149 = tpu.concatenate %144, %148 in 1 : vector<32x32xf32>, vector<32x32xf32> -> vector<32x64xf32>
    %c96_58 = arith.constant 96 : index
    %c0_59 = arith.constant 0 : index
    %150 = vector.load %arg7[%c96_58, %c0_59] : memref<256x32xbf16, #tpu.memory_space<vmem>>, vector<64x32xbf16>
    %151 = arith.truncf %149 : vector<32x64xf32> to vector<32x64xbf16>
    %cst_60 = arith.constant dense<0.000000e+00> : vector<32x32xf32>
    %152 = tpu.matmul %151, %150, %cst_60 {dimension_numbers = #tpu.dot_dimension_numbers<[1], [0], [0], [1], [0, 0, 1, 1], [], []>} : vector<32x64xbf16>, vector<64x32xbf16>, vector<32x32xf32> -> vector<32x32xf32>
    %153 = vector.broadcast %128 : vector<1x32xf32> to vector<32x32xf32>
    %154 = arith.addf %152, %153 : vector<32x32xf32>
    %cst_61 = arith.constant 0.000000e+00 : f32
    %155 = vector.broadcast %cst_61 : f32 to vector<32x32xf32>
    %156 = arith.maximumf %154, %155 : vector<32x32xf32>
    %c160_62 = arith.constant 160 : index
    %c0_63 = arith.constant 0 : index
    %157 = vector.load %arg7[%c160_62, %c0_63] : memref<256x32xbf16, #tpu.memory_space<vmem>>, vector<32x32xbf16>
    %158 = arith.truncf %156 : vector<32x32xf32> to vector<32x32xbf16>
    %cst_64 = arith.constant dense<0.000000e+00> : vector<32x32xf32>
    %159 = tpu.matmul %158, %157, %cst_64 {dimension_numbers = #tpu.dot_dimension_numbers<[1], [0], [0], [1], [0, 0, 1, 1], [], []>} : vector<32x32xbf16>, vector<32x32xbf16>, vector<32x32xf32> -> vector<32x32xf32>
    %160 = vector.broadcast %129 : vector<1x32xf32> to vector<32x32xf32>
    %161 = arith.addf %159, %160 : vector<32x32xf32>
    %cst_65 = arith.constant 0.000000e+00 : f32
    %162 = vector.broadcast %cst_65 : f32 to vector<32x32xf32>
    %163 = arith.maximumf %161, %162 : vector<32x32xf32>
    %164 = vector.broadcast %131 : vector<1x32xf32> to vector<32x32xf32>
    %165 = arith.mulf %163, %164 : vector<32x32xf32>
    %cst_66 = arith.constant dense<0.000000e+00> : vector<32xf32>
    %166 = vector.multi_reduction <add>, %165, %cst_66 [1] : vector<32x32xf32> to vector<32xf32>
    %167 = vector.shape_cast %166 : vector<32xf32> to vector<32x1xf32>
    %168 = vector.shape_cast %167 : vector<32x1xf32> to vector<4x8x1xf32>
    %cst_67 = arith.constant dense<0xFF800000> : vector<4x1xf32>
    %169 = vector.multi_reduction <maximumf>, %168, %cst_67 [1] : vector<4x8x1xf32> to vector<4x1xf32>
    %170 = vector.shape_cast %169 : vector<4x1xf32> to vector<4x1x1xf32>
    %171 = vector.broadcast %170 : vector<4x1x1xf32> to vector<4x8x1xf32>
    %172 = arith.subf %168, %171 : vector<4x8x1xf32>
    %173 = math.exp %172 : vector<4x8x1xf32>
    %cst_68 = arith.constant dense<0.000000e+00> : vector<4x1xf32>
    %174 = vector.multi_reduction <add>, %173, %cst_68 [1] : vector<4x8x1xf32> to vector<4x1xf32>
    %175 = vector.shape_cast %174 : vector<4x1xf32> to vector<4x1x1xf32>
    %176 = tpu.reciprocal %175 {approx = true} : vector<4x1x1xf32> -> vector<4x1x1xf32>
    %177 = vector.broadcast %176 : vector<4x1x1xf32> to vector<4x8x1xf32>
    %178 = arith.mulf %173, %177 : vector<4x8x1xf32>
    %179 = vector.shape_cast %144 : vector<32x32xf32> to vector<4x8x32xf32>
    %180 = vector.broadcast %178 : vector<4x8x1xf32> to vector<4x8x32xf32>
    %181 = arith.mulf %179, %180 : vector<4x8x32xf32>
    %cst_69 = arith.constant dense<0.000000e+00> : vector<4x32xf32>
    %182 = vector.multi_reduction <add>, %181, %cst_69 [1] : vector<4x8x32xf32> to vector<4x32xf32>
    %183 = tpu.concatenate %3, %182 in 1 : vector<4x32xf32>, vector<4x32xf32> -> vector<4x64xf32>
    %c192_70 = arith.constant 192 : index
    %c0_71 = arith.constant 0 : index
    %184 = vector.load %arg7[%c192_70, %c0_71] : memref<256x32xbf16, #tpu.memory_space<vmem>>, vector<64x32xbf16>
    %185 = arith.truncf %183 : vector<4x64xf32> to vector<4x64xbf16>
    %cst_72 = arith.constant dense<0.000000e+00> : vector<4x32xf32>
    %186 = tpu.matmul %185, %184, %cst_72 {dimension_numbers = #tpu.dot_dimension_numbers<[1], [0], [0], [1], [0, 0, 1, 1], [], []>} : vector<4x64xbf16>, vector<64x32xbf16>, vector<4x32xf32> -> vector<4x32xf32>
    %187 = vector.broadcast %130 : vector<1x32xf32> to vector<4x32xf32>
    %188 = arith.addf %186, %187 : vector<4x32xf32>
    %cst_73 = arith.constant 0.000000e+00 : f32
    %189 = vector.broadcast %cst_73 : f32 to vector<4x32xf32>
    %190 = arith.maximumf %188, %189 : vector<4x32xf32>
    %c0_74 = arith.constant 0 : index
    %c0_75 = arith.constant 0 : index
    %191 = vector.load %arg12[%c0_74, %c0_75] : memref<12x32xf32, #tpu.memory_space<vmem>>, vector<12x32xf32>
    %192 = vector.extract_strided_slice %191 {offsets = [0, 0], sizes = [1, 32], strides = [1, 1]} : vector<12x32xf32> to vector<1x32xf32>
    %193 = vector.extract_strided_slice %191 {offsets = [1, 0], sizes = [1, 32], strides = [1, 1]} : vector<12x32xf32> to vector<1x32xf32>
    %194 = vector.extract_strided_slice %191 {offsets = [2, 0], sizes = [1, 32], strides = [1, 1]} : vector<12x32xf32> to vector<1x32xf32>
    %195 = vector.extract_strided_slice %191 {offsets = [3, 0], sizes = [1, 32], strides = [1, 1]} : vector<12x32xf32> to vector<1x32xf32>
    %196 = vector.extract_strided_slice %191 {offsets = [4, 0], sizes = [1, 32], strides = [1, 1]} : vector<12x32xf32> to vector<1x32xf32>
    %197 = vector.extract_strided_slice %191 {offsets = [5, 0], sizes = [1, 32], strides = [1, 1]} : vector<12x32xf32> to vector<1x32xf32>
    %198 = vector.extract_strided_slice %191 {offsets = [6, 0], sizes = [1, 32], strides = [1, 1]} : vector<12x32xf32> to vector<1x32xf32>
    %199 = vector.extract_strided_slice %191 {offsets = [7, 0], sizes = [1, 32], strides = [1, 1]} : vector<12x32xf32> to vector<1x32xf32>
    %200 = vector.extract_strided_slice %191 {offsets = [8, 0], sizes = [1, 32], strides = [1, 1]} : vector<12x32xf32> to vector<1x32xf32>
    %201 = vector.extract_strided_slice %191 {offsets = [9, 0], sizes = [1, 32], strides = [1, 1]} : vector<12x32xf32> to vector<1x32xf32>
    %202 = vector.extract_strided_slice %191 {offsets = [10, 0], sizes = [1, 32], strides = [1, 1]} : vector<12x32xf32> to vector<1x32xf32>
    %203 = vector.extract_strided_slice %191 {offsets = [11, 0], sizes = [1, 32], strides = [1, 1]} : vector<12x32xf32> to vector<1x32xf32>
    %c0_76 = arith.constant 0 : index
    %c0_77 = arith.constant 0 : index
    %204 = vector.load %arg14[%c0_76, %c0_77] : memref<5x16xf32, #tpu.memory_space<vmem>>, vector<5x16xf32>
    %205 = vector.extract_strided_slice %204 {offsets = [0, 0], sizes = [1, 16], strides = [1, 1]} : vector<5x16xf32> to vector<1x16xf32>
    %206 = vector.extract_strided_slice %204 {offsets = [1, 0], sizes = [1, 16], strides = [1, 1]} : vector<5x16xf32> to vector<1x16xf32>
    %207 = vector.extract_strided_slice %204 {offsets = [2, 0], sizes = [1, 16], strides = [1, 1]} : vector<5x16xf32> to vector<1x16xf32>
    %208 = vector.extract_strided_slice %204 {offsets = [3, 0], sizes = [1, 16], strides = [1, 1]} : vector<5x16xf32> to vector<1x16xf32>
    %209 = vector.extract_strided_slice %204 {offsets = [4, 0], sizes = [1, 1], strides = [1, 1]} : vector<5x16xf32> to vector<1x1xf32>
    %210 = tpu.concatenate %70, %123 in 1 : vector<4x32xf32>, vector<4x32xf32> -> vector<4x64xf32>
    %c0_78 = arith.constant 0 : index
    %c0_79 = arith.constant 0 : index
    %211 = vector.load %arg11[%c0_78, %c0_79] : memref<256x32xbf16, #tpu.memory_space<vmem>>, vector<64x32xbf16>
    %212 = arith.truncf %210 : vector<4x64xf32> to vector<4x64xbf16>
    %cst_80 = arith.constant dense<0.000000e+00> : vector<4x32xf32>
    %213 = tpu.matmul %212, %211, %cst_80 {dimension_numbers = #tpu.dot_dimension_numbers<[1], [0], [0], [1], [0, 0, 1, 1], [], []>} : vector<4x64xbf16>, vector<64x32xbf16>, vector<4x32xf32> -> vector<4x32xf32>
    %214 = vector.broadcast %192 : vector<1x32xf32> to vector<4x32xf32>
    %215 = arith.addf %213, %214 : vector<4x32xf32>
    %cst_81 = arith.constant 0.000000e+00 : f32
    %216 = vector.broadcast %cst_81 : f32 to vector<4x32xf32>
    %217 = arith.maximumf %215, %216 : vector<4x32xf32>
    %c64_82 = arith.constant 64 : index
    %c0_83 = arith.constant 0 : index
    %218 = vector.load %arg11[%c64_82, %c0_83] : memref<256x32xbf16, #tpu.memory_space<vmem>>, vector<32x32xbf16>
    %219 = arith.truncf %217 : vector<4x32xf32> to vector<4x32xbf16>
    %cst_84 = arith.constant dense<0.000000e+00> : vector<4x32xf32>
    %220 = tpu.matmul %219, %218, %cst_84 {dimension_numbers = #tpu.dot_dimension_numbers<[1], [0], [0], [1], [0, 0, 1, 1], [], []>} : vector<4x32xbf16>, vector<32x32xbf16>, vector<4x32xf32> -> vector<4x32xf32>
    %221 = vector.broadcast %193 : vector<1x32xf32> to vector<4x32xf32>
    %222 = arith.addf %220, %221 : vector<4x32xf32>
    %223 = vector.broadcast %198 : vector<1x32xf32> to vector<4x32xf32>
    %224 = arith.mulf %222, %223 : vector<4x32xf32>
    %225 = vector.broadcast %199 : vector<1x32xf32> to vector<4x32xf32>
    %226 = arith.addf %224, %225 : vector<4x32xf32>
    %cst_85 = arith.constant 0.000000e+00 : f32
    %227 = vector.broadcast %cst_85 : f32 to vector<4x32xf32>
    %228 = arith.maximumf %226, %227 : vector<4x32xf32>
    %c96_86 = arith.constant 96 : index
    %c0_87 = arith.constant 0 : index
    %229 = vector.load %arg11[%c96_86, %c0_87] : memref<256x32xbf16, #tpu.memory_space<vmem>>, vector<32x32xbf16>
    %230 = arith.truncf %228 : vector<4x32xf32> to vector<4x32xbf16>
    %cst_88 = arith.constant dense<0.000000e+00> : vector<4x32xf32>
    %231 = tpu.matmul %230, %229, %cst_88 {dimension_numbers = #tpu.dot_dimension_numbers<[1], [0], [0], [1], [0, 0, 1, 1], [], []>} : vector<4x32xbf16>, vector<32x32xbf16>, vector<4x32xf32> -> vector<4x32xf32>
    %232 = vector.broadcast %194 : vector<1x32xf32> to vector<4x32xf32>
    %233 = arith.addf %231, %232 : vector<4x32xf32>
    %c128 = arith.constant 128 : index
    %c0_89 = arith.constant 0 : index
    %234 = vector.load %arg11[%c128, %c0_89] : memref<256x32xbf16, #tpu.memory_space<vmem>>, vector<32x32xbf16>
    %235 = arith.truncf %190 : vector<4x32xf32> to vector<4x32xbf16>
    %cst_90 = arith.constant dense<0.000000e+00> : vector<4x32xf32>
    %236 = tpu.matmul %235, %234, %cst_90 {dimension_numbers = #tpu.dot_dimension_numbers<[1], [0], [0], [1], [0, 0, 1, 1], [], []>} : vector<4x32xbf16>, vector<32x32xbf16>, vector<4x32xf32> -> vector<4x32xf32>
    %237 = vector.broadcast %195 : vector<1x32xf32> to vector<4x32xf32>
    %238 = arith.addf %236, %237 : vector<4x32xf32>
    %239 = vector.broadcast %200 : vector<1x32xf32> to vector<4x32xf32>
    %240 = arith.mulf %238, %239 : vector<4x32xf32>
    %241 = vector.broadcast %201 : vector<1x32xf32> to vector<4x32xf32>
    %242 = arith.addf %240, %241 : vector<4x32xf32>
    %cst_91 = arith.constant 0.000000e+00 : f32
    %243 = vector.broadcast %cst_91 : f32 to vector<4x32xf32>
    %244 = arith.maximumf %242, %243 : vector<4x32xf32>
    %c160_92 = arith.constant 160 : index
    %c0_93 = arith.constant 0 : index
    %245 = vector.load %arg11[%c160_92, %c0_93] : memref<256x32xbf16, #tpu.memory_space<vmem>>, vector<32x32xbf16>
    %246 = arith.truncf %244 : vector<4x32xf32> to vector<4x32xbf16>
    %cst_94 = arith.constant dense<0.000000e+00> : vector<4x32xf32>
    %247 = tpu.matmul %246, %245, %cst_94 {dimension_numbers = #tpu.dot_dimension_numbers<[1], [0], [0], [1], [0, 0, 1, 1], [], []>} : vector<4x32xbf16>, vector<32x32xbf16>, vector<4x32xf32> -> vector<4x32xf32>
    %248 = vector.broadcast %196 : vector<1x32xf32> to vector<4x32xf32>
    %249 = arith.addf %247, %248 : vector<4x32xf32>
    %250 = tpu.concatenate %233, %249 in 1 : vector<4x32xf32>, vector<4x32xf32> -> vector<4x64xf32>
    %c192_95 = arith.constant 192 : index
    %c0_96 = arith.constant 0 : index
    %251 = vector.load %arg11[%c192_95, %c0_96] : memref<256x32xbf16, #tpu.memory_space<vmem>>, vector<64x32xbf16>
    %252 = arith.truncf %250 : vector<4x64xf32> to vector<4x64xbf16>
    %cst_97 = arith.constant dense<0.000000e+00> : vector<4x32xf32>
    %253 = tpu.matmul %252, %251, %cst_97 {dimension_numbers = #tpu.dot_dimension_numbers<[1], [0], [0], [1], [0, 0, 1, 1], [], []>} : vector<4x64xbf16>, vector<64x32xbf16>, vector<4x32xf32> -> vector<4x32xf32>
    %254 = vector.broadcast %197 : vector<1x32xf32> to vector<4x32xf32>
    %255 = arith.addf %253, %254 : vector<4x32xf32>
    %256 = vector.broadcast %202 : vector<1x32xf32> to vector<4x32xf32>
    %257 = arith.mulf %255, %256 : vector<4x32xf32>
    %258 = vector.broadcast %203 : vector<1x32xf32> to vector<4x32xf32>
    %259 = arith.addf %257, %258 : vector<4x32xf32>
    %cst_98 = arith.constant 0.000000e+00 : f32
    %260 = vector.broadcast %cst_98 : f32 to vector<4x32xf32>
    %261 = arith.maximumf %259, %260 : vector<4x32xf32>
    %c0_99 = arith.constant 0 : index
    %c0_100 = arith.constant 0 : index
    %262 = vector.load %arg13[%c0_99, %c0_100] : memref<32x16xbf16, #tpu.memory_space<vmem>>, vector<32x16xbf16>
    %263 = arith.truncf %261 : vector<4x32xf32> to vector<4x32xbf16>
    %cst_101 = arith.constant dense<0.000000e+00> : vector<4x16xf32>
    %264 = tpu.matmul %263, %262, %cst_101 {dimension_numbers = #tpu.dot_dimension_numbers<[1], [0], [0], [1], [0, 0, 1, 1], [], []>} : vector<4x32xbf16>, vector<32x16xbf16>, vector<4x16xf32> -> vector<4x16xf32>
    %265 = vector.broadcast %205 : vector<1x16xf32> to vector<4x16xf32>
    %266 = arith.addf %264, %265 : vector<4x16xf32>
    %267 = vector.broadcast %206 : vector<1x16xf32> to vector<4x16xf32>
    %268 = arith.mulf %266, %267 : vector<4x16xf32>
    %269 = vector.broadcast %207 : vector<1x16xf32> to vector<4x16xf32>
    %270 = arith.addf %268, %269 : vector<4x16xf32>
    %cst_102 = arith.constant 0.000000e+00 : f32
    %271 = vector.broadcast %cst_102 : f32 to vector<4x16xf32>
    %272 = arith.maximumf %270, %271 : vector<4x16xf32>
    %273 = vector.broadcast %208 : vector<1x16xf32> to vector<4x16xf32>
    %274 = arith.mulf %272, %273 : vector<4x16xf32>
    %cst_103 = arith.constant dense<0.000000e+00> : vector<4xf32>
    %275 = vector.multi_reduction <add>, %274, %cst_103 [1] : vector<4x16xf32> to vector<4xf32>
    %276 = vector.shape_cast %275 : vector<4xf32> to vector<4x1xf32>
    %277 = vector.broadcast %209 : vector<1x1xf32> to vector<4x1xf32>
    %278 = arith.addf %276, %277 : vector<4x1xf32>
    %279 = vector.shape_cast %278 : vector<4x1xf32> to vector<4x1xf32>
    %280 = vector.broadcast %279 : vector<4x1xf32> to vector<4x128xf32>
    %c0_104 = arith.constant 0 : index
    %c0_105 = arith.constant 0 : index
    %281 = vector.load %arg15[%c0_104, %c0_105] : memref<4x128xf32, #tpu.memory_space<vmem>>, vector<4x128xf32>
    tpu.vector_store %arg15[%c0_104, %c0_105], %280 {strides = array<i32>} : memref<4x128xf32, #tpu.memory_space<vmem>>, vector<4x128xf32>,
    return
  }
}

</mosaic_0001>

<llo_original>
// kernel: model_forward.1
$region0: #{model_forward.1}
  #allocation0 [shape = 'u32[]', space=smem, size = 0x4, offset = 0x4, fixed_abs, tag = 'smem constant byte address 0x4 - core index']
  #allocation1 [shape = 'u32[144,128]{1,0:T(1,128)}', space=vmem, size = 0x12000, scoped, tag = 'internal scratch']
  %s0 = inlined_call_operand.vmem [shape: bf16[32,64], index: 0, kind: input, shape index: {}]
  %s1 = inlined_call_operand.vmem [shape: bf16[4,32], index: 1, kind: input, shape index: {}]
  %s2 = inlined_call_operand.vmem [shape: bf16[32,32], index: 2, kind: input, shape index: {}]
  %s3 = inlined_call_operand.vmem [shape: bf16[32,64], index: 3, kind: input, shape index: {}]
  %s4 = inlined_call_operand.vmem [shape: bf16[4,32], index: 4, kind: input, shape index: {}]
  %s5 = inlined_call_operand.vmem [shape: bf16[256,32], index: 5, kind: input, shape index: {}]
  %s6 = inlined_call_operand.vmem [shape: f32[6,32], index: 6, kind: input, shape index: {}]
  %s7 = inlined_call_operand.vmem [shape: bf16[256,32], index: 7, kind: input, shape index: {}]
  %s8 = inlined_call_operand.vmem [shape: f32[6,32], index: 8, kind: input, shape index: {}]
  %s9 = inlined_call_operand.vmem [shape: bf16[160,32], index: 9, kind: input, shape index: {}]
  %s10 = inlined_call_operand.vmem [shape: f32[4,32], index: 10, kind: input, shape index: {}]
  %s11 = inlined_call_operand.vmem [shape: bf16[256,32], index: 11, kind: input, shape index: {}]
  %s12 = inlined_call_operand.vmem [shape: f32[12,32], index: 12, kind: input, shape index: {}]
  %s13 = inlined_call_operand.vmem [shape: bf16[32,16], index: 13, kind: input, shape index: {}]
  %s14 = inlined_call_operand.vmem [shape: f32[5,16], index: 14, kind: input, shape index: {}]
  %s15 = inlined_call_operand.vmem [shape: f32[4,128], index: 15, kind: output, shape index: {}]
  %s16 = sld [smem:[#allocation0]]
  $region70: #{model_forward.1} parent=0
    _
  %s18 = ssub.s32 1, %s16
  %s19 = scalar_select 0, %s18, %s16
  // Predicated region
  $region2: #{model_forward.1} parent=0 // pred_check
    _
  $region3: #{model_forward.1} parent=0 // pred_check_branch
    %21 = sbr.rel (0) target = $region5
  $region4: #{model_forward.1} parent=0 // pred_region
    _
  $region5: #{model_forward.1} parent=0 // pred_fallthru
    _
  // Predicated region
  $region6: #{model_forward.1} parent=0 // pred_check
    _
  $region7: #{model_forward.1} parent=0 // pred_check_branch
    %23 = sbr.rel (0) target = $region9
  $region8: #{model_forward.1} parent=0 // pred_region
    _
  $region9: #{model_forward.1} parent=0 // pred_fallthru
    _
  // Predicated region
  $region10: #{model_forward.1} parent=0 // pred_check
    _
  $region11: #{model_forward.1} parent=0 // pred_check_branch
    %25 = sbr.rel (0) target = $region13
  $region12: #{model_forward.1} parent=0 // pred_region
    _
  $region13: #{model_forward.1} parent=0 // pred_fallthru
    _
  // Predicated region
  $region14: #{model_forward.1} parent=0 // pred_check
    _
  $region15: #{model_forward.1} parent=0 // pred_check_branch
    %27 = sbr.rel (0) target = $region17
  $region16: #{model_forward.1} parent=0 // pred_region
    _
  $region17: #{model_forward.1} parent=0 // pred_fallthru
    _
  // Predicated region
  $region18: #{model_forward.1} parent=0 // pred_check
    _
  $region19: #{model_forward.1} parent=0 // pred_check_branch
    %29 = sbr.rel (0) target = $region21
  $region20: #{model_forward.1} parent=0 // pred_region
    _
  $region21: #{model_forward.1} parent=0 // pred_fallthru
    _
  // Predicated region
  $region22: #{model_forward.1} parent=0 // pred_check
    _
  $region23: #{model_forward.1} parent=0 // pred_check_branch
    %31 = sbr.rel (0) target = $region25
  $region24: #{model_forward.1} parent=0 // pred_region
    _
  $region25: #{model_forward.1} parent=0 // pred_fallthru
    _
  // Predicated region
  $region26: #{model_forward.1} parent=0 // pred_check
    _
  $region27: #{model_forward.1} parent=0 // pred_check_branch
    %33 = sbr.rel (0) target = $region29
  $region28: #{model_forward.1} parent=0 // pred_region
    _
  $region29: #{model_forward.1} parent=0 // pred_fallthru
    _
  // Predicated region
  $region30: #{model_forward.1} parent=0 // pred_check
    _
  $region31: #{model_forward.1} parent=0 // pred_check_branch
    %35 = sbr.rel (0) target = $region33
  $region32: #{model_forward.1} parent=0 // pred_region
    _
  $region33: #{model_forward.1} parent=0 // pred_fallthru
    _
  // Predicated region
  $region34: #{model_forward.1} parent=0 // pred_check
    _
  $region35: #{model_forward.1} parent=0 // pred_check_branch
    %37 = sbr.rel (0) target = $region37
  $region36: #{model_forward.1} parent=0 // pred_region
    _
  $region37: #{model_forward.1} parent=0 // pred_fallthru
    _
  // Predicated region
  $region38: #{model_forward.1} parent=0 // pred_check
    _
  $region39: #{model_forward.1} parent=0 // pred_check_branch
    %39 = sbr.rel (0) target = $region41
  $region40: #{model_forward.1} parent=0 // pred_region
    _
  $region41: #{model_forward.1} parent=0 // pred_fallthru
    _
  // Predicated region
  $region42: #{model_forward.1} parent=0 // pred_check
    _
  $region43: #{model_forward.1} parent=0 // pred_check_branch
    %41 = sbr.rel (0) target = $region45
  $region44: #{model_forward.1} parent=0 // pred_region
    _
  $region45: #{model_forward.1} parent=0 // pred_fallthru
    _
  // Predicated region
  $region46: #{model_forward.1} parent=0 // pred_check
    _
  $region47: #{model_forward.1} parent=0 // pred_check_branch
    %43 = sbr.rel (0) target = $region49
  $region48: #{model_forward.1} parent=0 // pred_region
    _
  $region49: #{model_forward.1} parent=0 // pred_fallthru
    _
  // Predicated region
  $region50: #{model_forward.1} parent=0 // pred_check
    _
  $region51: #{model_forward.1} parent=0 // pred_check_branch
    %45 = sbr.rel (0) target = $region53
  $region52: #{model_forward.1} parent=0 // pred_region
    _
  $region53: #{model_forward.1} parent=0 // pred_fallthru
    _
  // Predicated region
  $region54: #{model_forward.1} parent=0 // pred_check
    _
  $region55: #{model_forward.1} parent=0 // pred_check_branch
    %47 = sbr.rel (0) target = $region57
  $region56: #{model_forward.1} parent=0 // pred_region
    _
  $region57: #{model_forward.1} parent=0 // pred_fallthru
    _
  // Predicated region
  $region58: #{model_forward.1} parent=0 // pred_check
    _
  $region59: #{model_forward.1} parent=0 // pred_check_branch
    %49 = sbr.rel (0) target = $region61
  $region60: #{model_forward.1} parent=0 // pred_region
    _
  $region61: #{model_forward.1} parent=0 // pred_fallthru
    _
  %v51 = vld [vmem:[%s1] sm:$0x3]
  %v52 = vunpack.c.l.bf16 %v51
  %v53 = vld [vmem:[%s4] sm:$0x3]
  %v54 = vunpack.c.l.bf16 %v53
  %v55 = vld [vmem:[%s0] sm:$0xf]
  %v56 = vld [vmem:[%s0 + $0x4] sm:$0xf]
  %v57 = vld [vmem:[%s0 + $0x8] sm:$0xf]
  %v58 = vld [vmem:[%s0 + $0xc] sm:$0xf]
  %v59 = vld [vmem:[%s6] sm:$0x3f]
  %v60 = vld [vmem:[%s5] sm:$0xf]
  %v61 = vld [vmem:[%s5 + $0x4] sm:$0xf]
  %v62 = vld [vmem:[%s5 + $0x8] sm:$0xf]
  %v63 = vld [vmem:[%s5 + $0xc] sm:$0xf]
  %v64 = vld [vmem:[%s5 + $0x10] sm:$0xf]
  %v65 = vld [vmem:[%s5 + $0x14] sm:$0xf]
  %v66 = vld [vmem:[%s5 + $0x18] sm:$0xf]
  %v67 = vld [vmem:[%s5 + $0x1c] sm:$0xf]
  %v68 = vlaneseq
  %v69 = vshrl.u32 %v68, 7
  %v70 = vsub.s32 0, %v69
  %v71 = vrot.slane %v59, %v70
  %v76 = vunpack.c.l.b16 %v55
  %v77 = vunpack.c.l.b16 %v56
  %v78 = vunpack.c.l.b16 %v57
  %v79 = vunpack.c.l.b16 %v58
  %v80 = vpack.c.b16 %v77, %v76
  %v81 = vpack.c.b16 %v79, %v78
  %v90 = vunpack.c.l.b16 %v60
  %v91 = vunpack.c.l.b16 %v61
  %v92 = vunpack.c.l.b16 %v62
  %v93 = vunpack.c.l.b16 %v63
  %v94 = vunpack.c.l.b16 %v64
  %v95 = vunpack.c.l.b16 %v65
  %v96 = vunpack.c.l.b16 %v66
  %v97 = vunpack.c.l.b16 %v67
  %v98 = vpack.c.b16 %v91, %v90
  %v99 = vpack.c.b16 %v93, %v92
  %v100 = vpack.c.b16 %v95, %v94
  %v101 = vpack.c.b16 %v97, %v96
  %vm106 = vcmask 523264
  %v108 = vsel %vm106, %v80, 0
  %v111 = vsel %vm106, %v81, 0
  %113 = vmatprep.subr.bf16.mxu0 0
  %114 = vmatpush1.bf16.msra.mxu0 %v98
  %115 = vmatprep.subr.bf16.mxu0 0
  %116 = vmatpush1.bf16.msra.mxu0 %v99
  %117 = vmatprep.subr.bf16.mxu0 0
  %118 = vmatpush1.bf16.msra.mxu0 %v100
  %119 = vmatprep.subr.bf16.mxu0 0
  %120 = vmatpush1.bf16.msra.mxu0 %v101
  %121 = vmatprep.subr.bf16.mxu0 0
  %122 = vmatpush1.bf16.msra.mxu0 0
  %123 = vmatprep.subr.bf16.mxu0 0
  %124 = vmatpush1.bf16.msra.mxu0 0
  %125 = vmatprep.subr.bf16.mxu0 0
  %126 = vmatpush1.bf16.msra.mxu0 0
  %127 = vmatprep.subr.bf16.mxu0 0
  %128 = vmatpush1.bf16.msra.mxu0 0
  %129 = vmatprep.subr.bf16.mxu0 0
  %130 = vmatpush1.bf16.msra.mxu0 0
  %131 = vmatprep.subr.bf16.mxu0 0
  %132 = vmatpush1.bf16.msra.mxu0 0
  %133 = vmatprep.subr.bf16.mxu0 0
  %134 = vmatpush1.bf16.msra.mxu0 0
  %135 = vmatprep.subr.bf16.mxu0 0
  %136 = vmatpush1.bf16.msra.mxu0 0
  %137 = vmatprep.subr.bf16.mxu0 0
  %138 = vmatpush1.bf16.msra.mxu0 0
  %139 = vmatprep.subr.bf16.mxu0 0
  %140 = vmatpush1.bf16.msra.mxu0 0
  %141 = vmatprep.subr.bf16.mxu0 0
  %142 = vmatpush1.bf16.msra.mxu0 0
  %143 = vmatprep.subr.bf16.mxu0 0
  %144 = vmatpush1.bf16.msra.mxu0 0
  %145 = vmatprep.mubr.bf16.mxu0 0
  %146 = vmatmul.mubr.bf16.gmra.mrb[0].mxu0 %v108
  %v147 = vpop.f32.mrb[0].mxu0
  %v148 = vadd.f32 %v71, %v147
  %v149 = vpop.f32.mrb[0].mxu0
  %v150 = vpop.f32.mrb[0].mxu0
  %v151 = vadd.f32 %v71, %v150
  %v152 = vpop.f32.mrb[0].mxu0
  %153 = vmatprep.mubr.bf16.mxu0 0
  %154 = vmatmul.mubr.bf16.gmra.mrb[0].mxu0 %v111
  %v155 = vpop.f32.mrb[0].mxu0
  %v156 = vadd.f32 %v71, %v155
  %v157 = vpop.f32.mrb[0].mxu0
  %v158 = vpop.f32.mrb[0].mxu0
  %v159 = vadd.f32 %v71, %v158
  %v160 = vpop.f32.mrb[0].mxu0
  %161 = vdwg.mxu0
  %v162 = vmax.f32 %v148, 0.0
  %v163 = vmax.f32 %v151, 0.0
  %v164 = vmax.f32 %v156, 0.0
  %v165 = vmax.f32 %v159, 0.0
  %v166 = vld [vmem:[%s5 + $0x20] sm:$0xf]
  %v167 = vld [vmem:[%s5 + $0x24] sm:$0xf]
  %v168 = vld [vmem:[%s5 + $0x28] sm:$0xf]
  %v169 = vld [vmem:[%s5 + $0x2c] sm:$0xf]
  %v170 = vpack.c.bf16 %v163, %v162
  %v171 = vpack.c.bf16 %v165, %v164
  %v172 = vlaneseq
  %v173 = vshrl.u32 %v172, 7
  %v174 = vsub.s32 1, %v173
  %v175 = vrot.slane %v59, %v174
  %v180 = vunpack.c.l.b16 %v166
  %v181 = vunpack.c.l.b16 %v167
  %v182 = vunpack.c.l.b16 %v168
  %v183 = vunpack.c.l.b16 %v169
  %v184 = vpack.c.b16 %v181, %v180
  %v185 = vpack.c.b16 %v183, %v182
  %vm188 = vcmask 261120
  %v190 = vsel %vm188, %v170, 0
  %v193 = vsel %vm188, %v171, 0
  %195 = vmatprep.subr.bf16.mxu0 0
  %196 = vmatpush1.bf16.msra.mxu0 %v184
  %197 = vmatprep.subr.bf16.mxu0 0
  %198 = vmatpush1.bf16.msra.mxu0 %v185
  %199 = vmatprep.subr.bf16.mxu0 0
  %200 = vmatpush1.bf16.msra.mxu0 0
  %201 = vmatprep.subr.bf16.mxu0 0
  %202 = vmatpush1.bf16.msra.mxu0 0
  %203 = vmatprep.subr.bf16.mxu0 0
  %204 = vmatpush1.bf16.msra.mxu0 0
  %205 = vmatprep.subr.bf16.mxu0 0
  %206 = vmatpush1.bf16.msra.mxu0 0
  %207 = vmatprep.subr.bf16.mxu0 0
  %208 = vmatpush1.bf16.msra.mxu0 0
  %209 = vmatprep.subr.bf16.mxu0 0
  %210 = vmatpush1.bf16.msra.mxu0 0
  %211 = vmatprep.subr.bf16.mxu0 0
  %212 = vmatpush1.bf16.msra.mxu0 0
  %213 = vmatprep.subr.bf16.mxu0 0
  %214 = vmatpush1.bf16.msra.mxu0 0
  %215 = vmatprep.subr.bf16.mxu0 0
  %216 = vmatpush1.bf16.msra.mxu0 0
  %217 = vmatprep.subr.bf16.mxu0 0
  %218 = vmatpush1.bf16.msra.mxu0 0
  %219 = vmatprep.subr.bf16.mxu0 0
  %220 = vmatpush1.bf16.msra.mxu0 0
  %221 = vmatprep.subr.bf16.mxu0 0
  %222 = vmatpush1.bf16.msra.mxu0 0
  %223 = vmatprep.subr.bf16.mxu0 0
  %224 = vmatpush1.bf16.msra.mxu0 0
  %225 = vmatprep.subr.bf16.mxu0 0
  %226 = vmatpush1.bf16.msra.mxu0 0
  %227 = vmatprep.mubr.bf16.mxu0 0
  %228 = vmatmul.mubr.bf16.gmra.mrb[0].mxu0 %v190
  %v229 = vpop.f32.mrb[0].mxu0
  %v230 = vadd.f32 %v175, %v229
  %v231 = vpop.f32.mrb[0].mxu0
  %v232 = vpop.f32.mrb[0].mxu0
  %v233 = vadd.f32 %v175, %v232
  %v234 = vpop.f32.mrb[0].mxu0
  %235 = vmatprep.mubr.bf16.mxu0 0
  %236 = vmatmul.mubr.bf16.gmra.mrb[0].mxu0 %v193
  %v237 = vpop.f32.mrb[0].mxu0
  %v238 = vadd.f32 %v175, %v237
  %v239 = vpop.f32.mrb[0].mxu0
  %v240 = vpop.f32.mrb[0].mxu0
  %v241 = vadd.f32 %v175, %v240
  %v242 = vpop.f32.mrb[0].mxu0
  %243 = vdwg.mxu0
  %v244 = vmax.f32 %v230, 0.0
  %v245 = vmax.f32 %v233, 0.0
  %v246 = vmax.f32 %v238, 0.0
  %v247 = vmax.f32 %v241, 0.0
  %v250 = vunpack.c.l.s4 1966171168
  %v251 = vunpack.c.0.s8 %v250
  %v252 = vlaneseq
  %v253 = vshrl.u32 %v252, 7
  %v254 = vsub.s32 %v251, %v253
  %v255 = vrot.slane %v52, %v254
  %v256 = vcombine.high %v255, %v255
  %v258 = vunpack.c.l.s4 1966171168
  %v259 = vunpack.c.0.s8 %v258
  %v260 = vlaneseq
  %v261 = vshrl.u32 %v260, 7
  %v262 = vsub.s32 %v259, %v261
  %v263 = vrot.slane %v255, %v262
  %v265 = vunpack.c.l.s4 1966171168
  %v266 = vunpack.c.0.s8 %v265
  %v267 = vlaneseq
  %v268 = vshrl.u32 %v267, 7
  %v269 = vsub.s32 %v266, %v268
  %v270 = vrot.slane %v256, %v269
  %v271 = vcombine.high %v263, %v263
  %v272 = vcombine.high %v270, %v270
  %v273 = vlaneseq
  %v274 = vshrl.u32 %v273, 7
  %v275 = vsub.s32 0, %v274
  %v276 = vrot.slane %v263, %v275
  %v277 = vlaneseq
  %v278 = vshrl.u32 %v277, 7
  %v279 = vsub.s32 0, %v278
  %v280 = vrot.slane %v270, %v279
  %v281 = vlaneseq
  %v282 = vshrl.u32 %v281, 7
  %v283 = vsub.s32 0, %v282
  %v284 = vrot.slane %v271, %v283
  %v285 = vlaneseq
  %v286 = vshrl.u32 %v285, 7
  %v287 = vsub.s32 0, %v286
  %v288 = vrot.slane %v272, %v287
  %289 = vrot.lane.b32.xlu0 %v276, 32
  %v290 = vpop.permute.xlu0 %289
  %291 = vrot.lane.b32.xlu0 %v280, 32
  %v292 = vpop.permute.xlu0 %291
  %293 = vrot.lane.b32.xlu0 %v284, 32
  %v294 = vpop.permute.xlu0 %293
  %295 = vrot.lane.b32.xlu0 %v288, 32
  %v296 = vpop.permute.xlu0 %295
  %v301 = vsel %vm188, %v244, %v290
  %v302 = vsel %vm188, %v245, %v292
  %v303 = vsel %vm188, %v246, %v294
  %v304 = vsel %vm188, %v247, %v296
  %v305 = vld [vmem:[%s5 + $0x30] sm:$0xf]
  %v306 = vld [vmem:[%s5 + $0x34] sm:$0xf]
  %v307 = vld [vmem:[%s5 + $0x38] sm:$0xf]
  %v308 = vld [vmem:[%s5 + $0x3c] sm:$0xf]
  %v309 = vld [vmem:[%s5 + $0x40] sm:$0xf]
  %v310 = vld [vmem:[%s5 + $0x44] sm:$0xf]
  %v311 = vld [vmem:[%s5 + $0x48] sm:$0xf]
  %v312 = vld [vmem:[%s5 + $0x4c] sm:$0xf]
  %v313 = vpack.c.bf16 %v302, %v301
  %v314 = vpack.c.bf16 %v304, %v303
  %v315 = vlaneseq
  %v316 = vshrl.u32 %v315, 7
  %v317 = vsub.s32 2, %v316
  %v318 = vrot.slane %v59, %v317
  %v327 = vunpack.c.l.b16 %v305
  %v328 = vunpack.c.l.b16 %v306
  %v329 = vunpack.c.l.b16 %v307
  %v330 = vunpack.c.l.b16 %v308
  %v331 = vunpack.c.l.b16 %v309
  %v332 = vunpack.c.l.b16 %v310
  %v333 = vunpack.c.l.b16 %v311
  %v334 = vunpack.c.l.b16 %v312
  %v335 = vpack.c.b16 %v328, %v327
  %v336 = vpack.c.b16 %v330, %v329
  %v337 = vpack.c.b16 %v332, %v331
  %v338 = vpack.c.b16 %v334, %v333
  %v344 = vsel %vm106, %v313, 0
  %v347 = vsel %vm106, %v314, 0
  %349 = vmatprep.subr.bf16.mxu0 0
  %350 = vmatpush1.bf16.msra.mxu0 %v335
  %351 = vmatprep.subr.bf16.mxu0 0
  %352 = vmatpush1.bf16.msra.mxu0 %v336
  %353 = vmatprep.subr.bf16.mxu0 0
  %354 = vmatpush1.bf16.msra.mxu0 %v337
  %355 = vmatprep.subr.bf16.mxu0 0
  %356 = vmatpush1.bf16.msra.mxu0 %v338
  %357 = vmatprep.subr.bf16.mxu0 0
  %358 = vmatpush1.bf16.msra.mxu0 0
  %359 = vmatprep.subr.bf16.mxu0 0
  %360 = vmatpush1.bf16.msra.mxu0 0
  %361 = vmatprep.subr.bf16.mxu0 0
  %362 = vmatpush1.bf16.msra.mxu0 0
  %363 = vmatprep.subr.bf16.mxu0 0
  %364 = vmatpush1.bf16.msra.mxu0 0
  %365 = vmatprep.subr.bf16.mxu0 0
  %366 = vmatpush1.bf16.msra.mxu0 0
  %367 = vmatprep.subr.bf16.mxu0 0
  %368 = vmatpush1.bf16.msra.mxu0 0
  %369 = vmatprep.subr.bf16.mxu0 0
  %370 = vmatpush1.bf16.msra.mxu0 0
  %371 = vmatprep.subr.bf16.mxu0 0
  %372 = vmatpush1.bf16.msra.mxu0 0
  %373 = vmatprep.subr.bf16.mxu0 0
  %374 = vmatpush1.bf16.msra.mxu0 0
  %375 = vmatprep.subr.bf16.mxu0 0
  %376 = vmatpush1.bf16.msra.mxu0 0
  %377 = vmatprep.subr.bf16.mxu0 0
  %378 = vmatpush1.bf16.msra.mxu0 0
  %379 = vmatprep.subr.bf16.mxu0 0
  %380 = vmatpush1.bf16.msra.mxu0 0
  %381 = vmatprep.mubr.bf16.mxu0 0
  %382 = vmatmul.mubr.bf16.gmra.mrb[0].mxu0 %v344
  %v383 = vpop.f32.mrb[0].mxu0
  %v384 = vadd.f32 %v318, %v383
  %v385 = vpop.f32.mrb[0].mxu0
  %v386 = vpop.f32.mrb[0].mxu0
  %v387 = vadd.f32 %v318, %v386
  %v388 = vpop.f32.mrb[0].mxu0
  %389 = vmatprep.mubr.bf16.mxu0 0
  %390 = vmatmul.mubr.bf16.gmra.mrb[0].mxu0 %v347
  %v391 = vpop.f32.mrb[0].mxu0
  %v392 = vadd.f32 %v318, %v391
  %v393 = vpop.f32.mrb[0].mxu0
  %v394 = vpop.f32.mrb[0].mxu0
  %v395 = vadd.f32 %v318, %v394
  %v396 = vpop.f32.mrb[0].mxu0
  %397 = vdwg.mxu0
  %v398 = vmax.f32 %v384, 0.0
  %v399 = vmax.f32 %v387, 0.0
  %v400 = vmax.f32 %v392, 0.0
  %v401 = vmax.f32 %v395, 0.0
  %v402 = vld [vmem:[%s5 + $0x50] sm:$0xf]
  %v403 = vld [vmem:[%s5 + $0x54] sm:$0xf]
  %v404 = vld [vmem:[%s5 + $0x58] sm:$0xf]
  %v405 = vld [vmem:[%s5 + $0x5c] sm:$0xf]
  %v406 = vpack.c.bf16 %v399, %v398
  %v407 = vpack.c.bf16 %v401, %v400
  %v408 = vlaneseq
  %v409 = vshrl.u32 %v408, 7
  %v410 = vsub.s32 3, %v409
  %v411 = vrot.slane %v59, %v410
  %v416 = vunpack.c.l.b16 %v402
  %v417 = vunpack.c.l.b16 %v403
  %v418 = vunpack.c.l.b16 %v404
  %v419 = vunpack.c.l.b16 %v405
  %v420 = vpack.c.b16 %v417, %v416
  %v421 = vpack.c.b16 %v419, %v418
  %v425 = vsel %vm188, %v406, 0
  %v428 = vsel %vm188, %v407, 0
  %430 = vmatprep.subr.bf16.mxu0 0
  %431 = vmatpush1.bf16.msra.mxu0 %v420
  %432 = vmatprep.subr.bf16.mxu0 0
  %433 = vmatpush1.bf16.msra.mxu0 %v421
  %434 = vmatprep.subr.bf16.mxu0 0
  %435 = vmatpush1.bf16.msra.mxu0 0
  %436 = vmatprep.subr.bf16.mxu0 0
  %437 = vmatpush1.bf16.msra.mxu0 0
  %438 = vmatprep.subr.bf16.mxu0 0
  %439 = vmatpush1.bf16.msra.mxu0 0
  %440 = vmatprep.subr.bf16.mxu0 0
  %441 = vmatpush1.bf16.msra.mxu0 0
  %442 = vmatprep.subr.bf16.mxu0 0
  %443 = vmatpush1.bf16.msra.mxu0 0
  %444 = vmatprep.subr.bf16.mxu0 0
  %445 = vmatpush1.bf16.msra.mxu0 0
  %446 = vmatprep.subr.bf16.mxu0 0
  %447 = vmatpush1.bf16.msra.mxu0 0
  %448 = vmatprep.subr.bf16.mxu0 0
  %449 = vmatpush1.bf16.msra.mxu0 0
  %450 = vmatprep.subr.bf16.mxu0 0
  %451 = vmatpush1.bf16.msra.mxu0 0
  %452 = vmatprep.subr.bf16.mxu0 0
  %453 = vmatpush1.bf16.msra.mxu0 0
  %454 = vmatprep.subr.bf16.mxu0 0
  %455 = vmatpush1.bf16.msra.mxu0 0
  %456 = vmatprep.subr.bf16.mxu0 0
  %457 = vmatpush1.bf16.msra.mxu0 0
  %458 = vmatprep.subr.bf16.mxu0 0
  %459 = vmatpush1.bf16.msra.mxu0 0
  %460 = vmatprep.subr.bf16.mxu0 0
  %461 = vmatpush1.bf16.msra.mxu0 0
  %462 = vmatprep.mubr.bf16.mxu0 0
  %463 = vmatmul.mubr.bf16.gmra.mrb[0].mxu0 %v425
  %v464 = vpop.f32.mrb[0].mxu0
  %v465 = vadd.f32 %v411, %v464
  %v466 = vpop.f32.mrb[0].mxu0
  %v467 = vpop.f32.mrb[0].mxu0
  %v468 = vadd.f32 %v411, %v467
  %v469 = vpop.f32.mrb[0].mxu0
  %470 = vmatprep.mubr.bf16.mxu0 0
  %471 = vmatmul.mubr.bf16.gmra.mrb[0].mxu0 %v428
  %v472 = vpop.f32.mrb[0].mxu0
  %v473 = vadd.f32 %v411, %v472
  %v474 = vpop.f32.mrb[0].mxu0
  %v475 = vpop.f32.mrb[0].mxu0
  %v476 = vadd.f32 %v411, %v475
  %v477 = vpop.f32.mrb[0].mxu0
  %478 = vdwg.mxu0
  %v479 = vmax.f32 %v465, 0.0
  %v480 = vmax.f32 %v468, 0.0
  %v481 = vmax.f32 %v473, 0.0
  %v482 = vmax.f32 %v476, 0.0
  %v483 = vlaneseq
  %v484 = vshrl.u32 %v483, 7
  %v485 = vsub.s32 5, %v484
  %v486 = vrot.slane %v59, %v485
  %v487 = vmul.f32 %v479, %v486
  %v488 = vmul.f32 %v480, %v486
  %v489 = vmul.f32 %v481, %v486
  %v490 = vmul.f32 %v482, %v486
  %v491 = vsel %vm188, %v487, 0.0
  %492 = vadd.xlane.f32.xlu0 %v491
  %v493 = vpop.xlane.xlu0 %492
  %v494 = vsel %vm188, %v488, 0.0
  %495 = vadd.xlane.f32.xlu0 %v494
  %v496 = vpop.xlane.xlu0 %495
  %v497 = vsel %vm188, %v489, 0.0
  %498 = vadd.xlane.f32.xlu0 %v497
  %v499 = vpop.xlane.xlu0 %498
  %v500 = vsel %vm188, %v490, 0.0
  %501 = vadd.xlane.f32.xlu0 %v500
  %v502 = vpop.xlane.xlu0 %501
  %v503 = vrot.slane %v493, 4
  %v504 = vmax.f32 %v493, %v503
  %v505 = vrot.slane %v504, 2
  %v506 = vmax.f32 %v504, %v505
  %v507 = vrot.slane %v506, 1
  %v508 = vmax.f32 %v506, %v507
  %v509 = vrot.slane %v496, 4
  %v510 = vmax.f32 %v496, %v509
  %v511 = vrot.slane %v510, 2
  %v512 = vmax.f32 %v510, %v511
  %v513 = vrot.slane %v512, 1
  %v514 = vmax.f32 %v512, %v513
  %v515 = vrot.slane %v499, 4
  %v516 = vmax.f32 %v499, %v515
  %v517 = vrot.slane %v516, 2
  %v518 = vmax.f32 %v516, %v517
  %v519 = vrot.slane %v518, 1
  %v520 = vmax.f32 %v518, %v519
  %v521 = vrot.slane %v502, 4
  %v522 = vmax.f32 %v502, %v521
  %v523 = vrot.slane %v522, 2
  %v524 = vmax.f32 %v522, %v523
  %v525 = vrot.slane %v524, 1
  %v526 = vmax.f32 %v524, %v525
  %v527 = vsub.f32 %v493, %v508
  %v528 = vsub.f32 %v496, %v514
  %v529 = vsub.f32 %v499, %v520
  %v530 = vsub.f32 %v502, %v526
  %v531 = vmul.f32 %v527, 1.442695
  %v532 = vpow.pop %v531
  %v533 = vmul.f32 %v528, 1.442695
  %v534 = vpow.pop %v533
  %v535 = vmul.f32 %v529, 1.442695
  %v536 = vpow.pop %v535
  %v537 = vmul.f32 %v530, 1.442695
  %v538 = vpow.pop %v537
  %v539 = vrot.slane %v532, 4
  %v540 = vadd.f32 %v532, %v539
  %v541 = vrot.slane %v540, 2
  %v542 = vadd.f32 %v540, %v541
  %v543 = vrot.slane %v542, 1
  %v544 = vadd.f32 %v542, %v543
  %v545 = vrot.slane %v534, 4
  %v546 = vadd.f32 %v534, %v545
  %v547 = vrot.slane %v546, 2
  %v548 = vadd.f32 %v546, %v547
  %v549 = vrot.slane %v548, 1
  %v550 = vadd.f32 %v548, %v549
  %v551 = vrot.slane %v536, 4
  %v552 = vadd.f32 %v536, %v551
  %v553 = vrot.slane %v552, 2
  %v554 = vadd.f32 %v552, %v553
  %v555 = vrot.slane %v554, 1
  %v556 = vadd.f32 %v554, %v555
  %v557 = vrot.slane %v538, 4
  %v558 = vadd.f32 %v538, %v557
  %v559 = vrot.slane %v558, 2
  %v560 = vadd.f32 %v558, %v559
  %v561 = vrot.slane %v560, 1
  %v562 = vadd.f32 %v560, %v561
  %v563 = vrcp.pop %v544
  %v564 = vrcp.pop %v550
  %v565 = vrcp.pop %v556
  %v566 = vrcp.pop %v562
  %v567 = vmul.f32 %v532, %v563
  %v568 = vmul.f32 %v534, %v564
  %v569 = vmul.f32 %v536, %v565
  %v570 = vmul.f32 %v538, %v566
  %v571 = vmul.f32 %v244, %v567
  %v572 = vmul.f32 %v245, %v568
  %v573 = vmul.f32 %v246, %v569
  %v574 = vmul.f32 %v247, %v570
  %v575 = vsel %vm188, %v571, 0.0
  %v576 = vrot.slane %v575, 4
  %v577 = vadd.f32 %v575, %v576
  %v578 = vrot.slane %v577, 2
  %v579 = vadd.f32 %v577, %v578
  %v580 = vrot.slane %v579, 1
  %v581 = vadd.f32 %v579, %v580
  %v582 = vsel %vm188, %v572, 0.0
  %v583 = vrot.slane %v582, 4
  %v584 = vadd.f32 %v582, %v583
  %v585 = vrot.slane %v584, 2
  %v586 = vadd.f32 %v584, %v585
  %v587 = vrot.slane %v586, 1
  %v588 = vadd.f32 %v586, %v587
  %v589 = vsel %vm188, %v573, 0.0
  %v590 = vrot.slane %v589, 4
  %v591 = vadd.f32 %v589, %v590
  %v592 = vrot.slane %v591, 2
  %v593 = vadd.f32 %v591, %v592
  %v594 = vrot.slane %v593, 1
  %v595 = vadd.f32 %v593, %v594
  %v596 = vsel %vm188, %v574, 0.0
  %v597 = vrot.slane %v596, 4
  %v598 = vadd.f32 %v596, %v597
  %v599 = vrot.slane %v598, 2
  %v600 = vadd.f32 %v598, %v599
  %v601 = vrot.slane %v600, 1
  %v602 = vadd.f32 %v600, %v601
  %vm607 = vcmask 1041409
  %v608 = vsel %vm607, %v588, %v581
  %vm609 = vcmask 1042434
  %v610 = vsel %vm609, %v595, %v608
  %vm611 = vcmask 1043459
  %v612 = vsel %vm611, %v602, %v610
  %613 = vrot.lane.b32.xlu0 %v612, 32
  %v614 = vpop.permute.xlu0 %613
  %v616 = vsel %vm188, %v52, %v614
  %v617 = vld [vmem:[%s5 + $0x60] sm:$0xf]
  %v618 = vld [vmem:[%s5 + $0x64] sm:$0xf]
  %v619 = vld [vmem:[%s5 + $0x68] sm:$0xf]
  %v620 = vld [vmem:[%s5 + $0x6c] sm:$0xf]
  %v621 = vld [vmem:[%s5 + $0x70] sm:$0xf]
  %v622 = vld [vmem:[%s5 + $0x74] sm:$0xf]
  %v623 = vld [vmem:[%s5 + $0x78] sm:$0xf]
  %v624 = vld [vmem:[%s5 + $0x7c] sm:$0xf]
  %v625 = vpack.c.bf16 %v616, %v616
  %v626 = vlaneseq
  %v627 = vshrl.u32 %v626, 7
  %v628 = vsub.s32 4, %v627
  %v629 = vrot.slane %v59, %v628
  %v638 = vunpack.c.l.b16 %v617
  %v639 = vunpack.c.l.b16 %v618
  %v640 = vunpack.c.l.b16 %v619
  %v641 = vunpack.c.l.b16 %v620
  %v642 = vunpack.c.l.b16 %v621
  %v643 = vunpack.c.l.b16 %v622
  %v644 = vunpack.c.l.b16 %v623
  %v645 = vunpack.c.l.b16 %v624
  %v646 = vpack.c.b16 %v639, %v638
  %v647 = vpack.c.b16 %v641, %v640
  %v648 = vpack.c.b16 %v643, %v642
  %v649 = vpack.c.b16 %v645, %v644
  %v655 = vsel %vm106, %v625, 0
  %657 = vmatprep.subr.bf16.mxu0 0
  %658 = vmatpush1.bf16.msra.mxu0 %v646
  %659 = vmatprep.subr.bf16.mxu0 0
  %660 = vmatpush1.bf16.msra.mxu0 %v647
  %661 = vmatprep.subr.bf16.mxu0 0
  %662 = vmatpush1.bf16.msra.mxu0 %v648
  %663 = vmatprep.subr.bf16.mxu0 0
  %664 = vmatpush1.bf16.msra.mxu0 %v649
  %665 = vmatprep.subr.bf16.mxu0 0
  %666 = vmatpush1.bf16.msra.mxu0 0
  %667 = vmatprep.subr.bf16.mxu0 0
  %668 = vmatpush1.bf16.msra.mxu0 0
  %669 = vmatprep.subr.bf16.mxu0 0
  %670 = vmatpush1.bf16.msra.mxu0 0
  %671 = vmatprep.subr.bf16.mxu0 0
  %672 = vmatpush1.bf16.msra.mxu0 0
  %673 = vmatprep.subr.bf16.mxu0 0
  %674 = vmatpush1.bf16.msra.mxu0 0
  %675 = vmatprep.subr.bf16.mxu0 0
  %676 = vmatpush1.bf16.msra.mxu0 0
  %677 = vmatprep.subr.bf16.mxu0 0
  %678 = vmatpush1.bf16.msra.mxu0 0
  %679 = vmatprep.subr.bf16.mxu0 0
  %680 = vmatpush1.bf16.msra.mxu0 0
  %681 = vmatprep.subr.bf16.mxu0 0
  %682 = vmatpush1.bf16.msra.mxu0 0
  %683 = vmatprep.subr.bf16.mxu0 0
  %684 = vmatpush1.bf16.msra.mxu0 0
  %685 = vmatprep.subr.bf16.mxu0 0
  %686 = vmatpush1.bf16.msra.mxu0 0
  %687 = vmatprep.subr.bf16.mxu0 0
  %688 = vmatpush1.bf16.msra.mxu0 0
  %689 = vmatprep.mubr.bf16.mxu0 0
  %690 = vmatmul.mubr.bf16.gmra.mrb[0].mxu0 %v655
  %v691 = vpop.f32.mrb[0].mxu0
  %v692 = vadd.f32 %v629, %v691
  %v693 = vpop.f32.mrb[0].mxu0
  %v694 = vpop.f32.mrb[0].mxu0
  %v695 = vpop.f32.mrb[0].mxu0
  %696 = vdwg.mxu0
  %v697 = vmax.f32 %v692, 0.0
  %v698 = vld [vmem:[%s2] sm:$0xf]
  %v699 = vld [vmem:[%s2 + $0x4] sm:$0xf]
  %v700 = vld [vmem:[%s2 + $0x8] sm:$0xf]
  %v701 = vld [vmem:[%s2 + $0xc] sm:$0xf]
  %v702 = vld [vmem:[%s10] sm:$0xf]
  %v703 = vunpack.c.l.bf16 %v698
  %v704 = vunpack.c.l.bf16 %v699
  %v705 = vunpack.c.l.bf16 %v700
  %v706 = vunpack.c.l.bf16 %v701
  %v707 = vsel %vm188, %v703, %v290
  %v708 = vsel %vm188, %v704, %v292
  %v709 = vsel %vm188, %v705, %v294
  %v710 = vsel %vm188, %v706, %v296
  %v711 = vld [vmem:[%s9] sm:$0xf]
  %v712 = vld [vmem:[%s9 + $0x4] sm:$0xf]
  %v713 = vld [vmem:[%s9 + $0x8] sm:$0xf]
  %v714 = vld [vmem:[%s9 + $0xc] sm:$0xf]
  %v715 = vld [vmem:[%s9 + $0x10] sm:$0xf]
  %v716 = vld [vmem:[%s9 + $0x14] sm:$0xf]
  %v717 = vld [vmem:[%s9 + $0x18] sm:$0xf]
  %v718 = vld [vmem:[%s9 + $0x1c] sm:$0xf]
  %v719 = vpack.c.bf16 %v708, %v707
  %v720 = vpack.c.bf16 %v710, %v709
  %v721 = vlaneseq
  %v722 = vshrl.u32 %v721, 7
  %v723 = vsub.s32 0, %v722
  %v724 = vrot.slane %v702, %v723
  %v733 = vunpack.c.l.b16 %v711
  %v734 = vunpack.c.l.b16 %v712
  %v735 = vunpack.c.l.b16 %v713
  %v736 = vunpack.c.l.b16 %v714
  %v737 = vunpack.c.l.b16 %v715
  %v738 = vunpack.c.l.b16 %v716
  %v739 = vunpack.c.l.b16 %v717
  %v740 = vunpack.c.l.b16 %v718
  %v741 = vpack.c.b16 %v734, %v733
  %v742 = vpack.c.b16 %v736, %v735
  %v743 = vpack.c.b16 %v738, %v737
  %v744 = vpack.c.b16 %v740, %v739
  %v750 = vsel %vm106, %v719, 0
  %v753 = vsel %vm106, %v720, 0
  %755 = vmatprep.subr.bf16.mxu0 0
  %756 = vmatpush1.bf16.msra.mxu0 %v741
  %757 = vmatprep.subr.bf16.mxu0 0
  %758 = vmatpush1.bf16.msra.mxu0 %v742
  %759 = vmatprep.subr.bf16.mxu0 0
  %760 = vmatpush1.bf16.msra.mxu0 %v743
  %761 = vmatprep.subr.bf16.mxu0 0
  %762 = vmatpush1.bf16.msra.mxu0 %v744
  %763 = vmatprep.subr.bf16.mxu0 0
  %764 = vmatpush1.bf16.msra.mxu0 0
  %765 = vmatprep.subr.bf16.mxu0 0
  %766 = vmatpush1.bf16.msra.mxu0 0
  %767 = vmatprep.subr.bf16.mxu0 0
  %768 = vmatpush1.bf16.msra.mxu0 0
  %769 = vmatprep.subr.bf16.mxu0 0
  %770 = vmatpush1.bf16.msra.mxu0 0
  %771 = vmatprep.subr.bf16.mxu0 0
  %772 = vmatpush1.bf16.msra.mxu0 0
  %773 = vmatprep.subr.bf16.mxu0 0
  %774 = vmatpush1.bf16.msra.mxu0 0
  %775 = vmatprep.subr.bf16.mxu0 0
  %776 = vmatpush1.bf16.msra.mxu0 0
  %777 = vmatprep.subr.bf16.mxu0 0
  %778 = vmatpush1.bf16.msra.mxu0 0
  %779 = vmatprep.subr.bf16.mxu0 0
  %780 = vmatpush1.bf16.msra.mxu0 0
  %781 = vmatprep.subr.bf16.mxu0 0
  %782 = vmatpush1.bf16.msra.mxu0 0
  %783 = vmatprep.subr.bf16.mxu0 0
  %784 = vmatpush1.bf16.msra.mxu0 0
  %785 = vmatprep.subr.bf16.mxu0 0
  %786 = vmatpush1.bf16.msra.mxu0 0
  %787 = vmatprep.mubr.bf16.mxu0 0
  %788 = vmatmul.mubr.bf16.gmra.mrb[0].mxu0 %v750
  %v789 = vpop.f32.mrb[0].mxu0
  %v790 = vadd.f32 %v724, %v789
  %v791 = vpop.f32.mrb[0].mxu0
  %v792 = vpop.f32.mrb[0].mxu0
  %v793 = vadd.f32 %v724, %v792
  %v794 = vpop.f32.mrb[0].mxu0
  %795 = vmatprep.mubr.bf16.mxu0 0
  %796 = vmatmul.mubr.bf16.gmra.mrb[0].mxu0 %v753
  %v797 = vpop.f32.mrb[0].mxu0
  %v798 = vadd.f32 %v724, %v797
  %v799 = vpop.f32.mrb[0].mxu0
  %v800 = vpop.f32.mrb[0].mxu0
  %v801 = vadd.f32 %v724, %v800
  %v802 = vpop.f32.mrb[0].mxu0
  %803 = vdwg.mxu0
  %v804 = vmax.f32 %v790, 0.0
  %v805 = vmax.f32 %v793, 0.0
  %v806 = vmax.f32 %v798, 0.0
  %v807 = vmax.f32 %v801, 0.0
  %v808 = vld [vmem:[%s9 + $0x20] sm:$0xf]
  %v809 = vld [vmem:[%s9 + $0x24] sm:$0xf]
  %v810 = vld [vmem:[%s9 + $0x28] sm:$0xf]
  %v811 = vld [vmem:[%s9 + $0x2c] sm:$0xf]
  %v812 = vpack.c.bf16 %v805, %v804
  %v813 = vpack.c.bf16 %v807, %v806
  %v814 = vlaneseq
  %v815 = vshrl.u32 %v814, 7
  %v816 = vsub.s32 1, %v815
  %v817 = vrot.slane %v702, %v816
  %v822 = vunpack.c.l.b16 %v808
  %v823 = vunpack.c.l.b16 %v809
  %v824 = vunpack.c.l.b16 %v810
  %v825 = vunpack.c.l.b16 %v811
  %v826 = vpack.c.b16 %v823, %v822
  %v827 = vpack.c.b16 %v825, %v824
  %v831 = vsel %vm188, %v812, 0
  %v834 = vsel %vm188, %v813, 0
  %836 = vmatprep.subr.bf16.mxu0 0
  %837 = vmatpush1.bf16.msra.mxu0 %v826
  %838 = vmatprep.subr.bf16.mxu0 0
  %839 = vmatpush1.bf16.msra.mxu0 %v827
  %840 = vmatprep.subr.bf16.mxu0 0
  %841 = vmatpush1.bf16.msra.mxu0 0
  %842 = vmatprep.subr.bf16.mxu0 0
  %843 = vmatpush1.bf16.msra.mxu0 0
  %844 = vmatprep.subr.bf16.mxu0 0
  %845 = vmatpush1.bf16.msra.mxu0 0
  %846 = vmatprep.subr.bf16.mxu0 0
  %847 = vmatpush1.bf16.msra.mxu0 0
  %848 = vmatprep.subr.bf16.mxu0 0
  %849 = vmatpush1.bf16.msra.mxu0 0
  %850 = vmatprep.subr.bf16.mxu0 0
  %851 = vmatpush1.bf16.msra.mxu0 0
  %852 = vmatprep.subr.bf16.mxu0 0
  %853 = vmatpush1.bf16.msra.mxu0 0
  %854 = vmatprep.subr.bf16.mxu0 0
  %855 = vmatpush1.bf16.msra.mxu0 0
  %856 = vmatprep.subr.bf16.mxu0 0
  %857 = vmatpush1.bf16.msra.mxu0 0
  %858 = vmatprep.subr.bf16.mxu0 0
  %859 = vmatpush1.bf16.msra.mxu0 0
  %860 = vmatprep.subr.bf16.mxu0 0
  %861 = vmatpush1.bf16.msra.mxu0 0
  %862 = vmatprep.subr.bf16.mxu0 0
  %863 = vmatpush1.bf16.msra.mxu0 0
  %864 = vmatprep.subr.bf16.mxu0 0
  %865 = vmatpush1.bf16.msra.mxu0 0
  %866 = vmatprep.subr.bf16.mxu0 0
  %867 = vmatpush1.bf16.msra.mxu0 0
  %868 = vmatprep.mubr.bf16.mxu0 0
  %869 = vmatmul.mubr.bf16.gmra.mrb[0].mxu0 %v831
  %v870 = vpop.f32.mrb[0].mxu0
  %v871 = vadd.f32 %v817, %v870
  %v872 = vpop.f32.mrb[0].mxu0
  %v873 = vpop.f32.mrb[0].mxu0
  %v874 = vadd.f32 %v817, %v873
  %v875 = vpop.f32.mrb[0].mxu0
  %876 = vmatprep.mubr.bf16.mxu0 0
  %877 = vmatmul.mubr.bf16.gmra.mrb[0].mxu0 %v834
  %v878 = vpop.f32.mrb[0].mxu0
  %v879 = vadd.f32 %v817, %v878
  %v880 = vpop.f32.mrb[0].mxu0
  %v881 = vpop.f32.mrb[0].mxu0
  %v882 = vadd.f32 %v817, %v881
  %v883 = vpop.f32.mrb[0].mxu0
  %884 = vdwg.mxu0
  %v885 = vmax.f32 %v871, 0.0
  %v886 = vmax.f32 %v874, 0.0
  %v887 = vmax.f32 %v879, 0.0
  %v888 = vmax.f32 %v882, 0.0
  %v889 = vlaneseq
  %v890 = vshrl.u32 %v889, 7
  %v891 = vsub.s32 3, %v890
  %v892 = vrot.slane %v702, %v891
  %v893 = vmul.f32 %v885, %v892
  %v894 = vmul.f32 %v886, %v892
  %v895 = vmul.f32 %v887, %v892
  %v896 = vmul.f32 %v888, %v892
  %v897 = vsel %vm188, %v893, 0.0
  %898 = vadd.xlane.f32.xlu0 %v897
  %v899 = vpop.xlane.xlu0 %898
  %v900 = vsel %vm188, %v894, 0.0
  %901 = vadd.xlane.f32.xlu0 %v900
  %v902 = vpop.xlane.xlu0 %901
  %v903 = vsel %vm188, %v895, 0.0
  %904 = vadd.xlane.f32.xlu0 %v903
  %v905 = vpop.xlane.xlu0 %904
  %v906 = vsel %vm188, %v896, 0.0
  %907 = vadd.xlane.f32.xlu0 %v906
  %v908 = vpop.xlane.xlu0 %907
  %v909 = vrot.slane %v899, 4
  %v910 = vmax.f32 %v899, %v909
  %v911 = vrot.slane %v910, 2
  %v912 = vmax.f32 %v910, %v911
  %v913 = vrot.slane %v912, 1
  %v914 = vmax.f32 %v912, %v913
  %v915 = vrot.slane %v902, 4
  %v916 = vmax.f32 %v902, %v915
  %v917 = vrot.slane %v916, 2
  %v918 = vmax.f32 %v916, %v917
  %v919 = vrot.slane %v918, 1
  %v920 = vmax.f32 %v918, %v919
  %v921 = vrot.slane %v905, 4
  %v922 = vmax.f32 %v905, %v921
  %v923 = vrot.slane %v922, 2
  %v924 = vmax.f32 %v922, %v923
  %v925 = vrot.slane %v924, 1
  %v926 = vmax.f32 %v924, %v925
  %v927 = vrot.slane %v908, 4
  %v928 = vmax.f32 %v908, %v927
  %v929 = vrot.slane %v928, 2
  %v930 = vmax.f32 %v928, %v929
  %v931 = vrot.slane %v930, 1
  %v932 = vmax.f32 %v930, %v931
  %v933 = vsub.f32 %v899, %v914
  %v934 = vsub.f32 %v902, %v920
  %v935 = vsub.f32 %v905, %v926
  %v936 = vsub.f32 %v908, %v932
  %v937 = vmul.f32 %v933, 1.442695
  %v938 = vpow.pop %v937
  %v939 = vmul.f32 %v934, 1.442695
  %v940 = vpow.pop %v939
  %v941 = vmul.f32 %v935, 1.442695
  %v942 = vpow.pop %v941
  %v943 = vmul.f32 %v936, 1.442695
  %v944 = vpow.pop %v943
  %v945 = vrot.slane %v938, 4
  %v946 = vadd.f32 %v938, %v945
  %v947 = vrot.slane %v946, 2
  %v948 = vadd.f32 %v946, %v947
  %v949 = vrot.slane %v948, 1
  %v950 = vadd.f32 %v948, %v949
  %v951 = vrot.slane %v940, 4
  %v952 = vadd.f32 %v940, %v951
  %v953 = vrot.slane %v952, 2
  %v954 = vadd.f32 %v952, %v953
  %v955 = vrot.slane %v954, 1
  %v956 = vadd.f32 %v954, %v955
  %v957 = vrot.slane %v942, 4
  %v958 = vadd.f32 %v942, %v957
  %v959 = vrot.slane %v958, 2
  %v960 = vadd.f32 %v958, %v959
  %v961 = vrot.slane %v960, 1
  %v962 = vadd.f32 %v960, %v961
  %v963 = vrot.slane %v944, 4
  %v964 = vadd.f32 %v944, %v963
  %v965 = vrot.slane %v964, 2
  %v966 = vadd.f32 %v964, %v965
  %v967 = vrot.slane %v966, 1
  %v968 = vadd.f32 %v966, %v967
  %v969 = vrcp.pop %v950
  %v970 = vrcp.pop %v956
  %v971 = vrcp.pop %v962
  %v972 = vrcp.pop %v968
  %v973 = vmul.f32 %v938, %v969
  %v974 = vmul.f32 %v940, %v970
  %v975 = vmul.f32 %v942, %v971
  %v976 = vmul.f32 %v944, %v972
  %v977 = vmul.f32 %v703, %v973
  %v978 = vmul.f32 %v704, %v974
  %v979 = vmul.f32 %v705, %v975
  %v980 = vmul.f32 %v706, %v976
  %v981 = vsel %vm188, %v977, 0.0
  %v982 = vrot.slane %v981, 4
  %v983 = vadd.f32 %v981, %v982
  %v984 = vrot.slane %v983, 2
  %v985 = vadd.f32 %v983, %v984
  %v986 = vrot.slane %v985, 1
  %v987 = vadd.f32 %v985, %v986
  %v988 = vsel %vm188, %v978, 0.0
  %v989 = vrot.slane %v988, 4
  %v990 = vadd.f32 %v988, %v989
  %v991 = vrot.slane %v990, 2
  %v992 = vadd.f32 %v990, %v991
  %v993 = vrot.slane %v992, 1
  %v994 = vadd.f32 %v992, %v993
  %v995 = vsel %vm188, %v979, 0.0
  %v996 = vrot.slane %v995, 4
  %v997 = vadd.f32 %v995, %v996
  %v998 = vrot.slane %v997, 2
  %v999 = vadd.f32 %v997, %v998
  %v1000 = vrot.slane %v999, 1
  %v1001 = vadd.f32 %v999, %v1000
  %v1002 = vsel %vm188, %v980, 0.0
  %v1003 = vrot.slane %v1002, 4
  %v1004 = vadd.f32 %v1002, %v1003
  %v1005 = vrot.slane %v1004, 2
  %v1006 = vadd.f32 %v1004, %v1005
  %v1007 = vrot.slane %v1006, 1
  %v1008 = vadd.f32 %v1006, %v1007
  %v1013 = vsel %vm607, %v994, %v987
  %v1014 = vsel %vm609, %v1001, %v1013
  %v1015 = vsel %vm611, %v1008, %v1014
  %1016 = vrot.lane.b32.xlu0 %v1015, 32
  %v1017 = vpop.permute.xlu0 %1016
  %v1019 = vsel %vm188, %v52, %v1017
  %v1020 = vld [vmem:[%s9 + $0x30] sm:$0xf]
  %v1021 = vld [vmem:[%s9 + $0x34] sm:$0xf]
  %v1022 = vld [vmem:[%s9 + $0x38] sm:$0xf]
  %v1023 = vld [vmem:[%s9 + $0x3c] sm:$0xf]
  %v1024 = vld [vmem:[%s9 + $0x40] sm:$0xf]
  %v1025 = vld [vmem:[%s9 + $0x44] sm:$0xf]
  %v1026 = vld [vmem:[%s9 + $0x48] sm:$0xf]
  %v1027 = vld [vmem:[%s9 + $0x4c] sm:$0xf]
  %v1028 = vpack.c.bf16 %v1019, %v1019
  %v1029 = vlaneseq
  %v1030 = vshrl.u32 %v1029, 7
  %v1031 = vsub.s32 2, %v1030
  %v1032 = vrot.slane %v702, %v1031
  %v1041 = vunpack.c.l.b16 %v1020
  %v1042 = vunpack.c.l.b16 %v1021
  %v1043 = vunpack.c.l.b16 %v1022
  %v1044 = vunpack.c.l.b16 %v1023
  %v1045 = vunpack.c.l.b16 %v1024
  %v1046 = vunpack.c.l.b16 %v1025
  %v1047 = vunpack.c.l.b16 %v1026
  %v1048 = vunpack.c.l.b16 %v1027
  %v1049 = vpack.c.b16 %v1042, %v1041
  %v1050 = vpack.c.b16 %v1044, %v1043
  %v1051 = vpack.c.b16 %v1046, %v1045
  %v1052 = vpack.c.b16 %v1048, %v1047
  %v1058 = vsel %vm106, %v1028, 0
  %1060 = vmatprep.subr.bf16.mxu0 0
  %1061 = vmatpush1.bf16.msra.mxu0 %v1049
  %1062 = vmatprep.subr.bf16.mxu0 0
  %1063 = vmatpush1.bf16.msra.mxu0 %v1050
  %1064 = vmatprep.subr.bf16.mxu0 0
  %1065 = vmatpush1.bf16.msra.mxu0 %v1051
  %1066 = vmatprep.subr.bf16.mxu0 0
  %1067 = vmatpush1.bf16.msra.mxu0 %v1052
  %1068 = vmatprep.subr.bf16.mxu0 0
  %1069 = vmatpush1.bf16.msra.mxu0 0
  %1070 = vmatprep.subr.bf16.mxu0 0
  %1071 = vmatpush1.bf16.msra.mxu0 0
  %1072 = vmatprep.subr.bf16.mxu0 0
  %1073 = vmatpush1.bf16.msra.mxu0 0
  %1074 = vmatprep.subr.bf16.mxu0 0
  %1075 = vmatpush1.bf16.msra.mxu0 0
  %1076 = vmatprep.subr.bf16.mxu0 0
  %1077 = vmatpush1.bf16.msra.mxu0 0
  %1078 = vmatprep.subr.bf16.mxu0 0
  %1079 = vmatpush1.bf16.msra.mxu0 0
  %1080 = vmatprep.subr.bf16.mxu0 0
  %1081 = vmatpush1.bf16.msra.mxu0 0
  %1082 = vmatprep.subr.bf16.mxu0 0
  %1083 = vmatpush1.bf16.msra.mxu0 0
  %1084 = vmatprep.subr.bf16.mxu0 0
  %1085 = vmatpush1.bf16.msra.mxu0 0
  %1086 = vmatprep.subr.bf16.mxu0 0
  %1087 = vmatpush1.bf16.msra.mxu0 0
  %1088 = vmatprep.subr.bf16.mxu0 0
  %1089 = vmatpush1.bf16.msra.mxu0 0
  %1090 = vmatprep.subr.bf16.mxu0 0
  %1091 = vmatpush1.bf16.msra.mxu0 0
  %1092 = vmatprep.mubr.bf16.mxu0 0
  %1093 = vmatmul.mubr.bf16.gmra.mrb[0].mxu0 %v1058
  %v1094 = vpop.f32.mrb[0].mxu0
  %v1095 = vadd.f32 %v1032, %v1094
  %v1096 = vpop.f32.mrb[0].mxu0
  %v1097 = vpop.f32.mrb[0].mxu0
  %v1098 = vpop.f32.mrb[0].mxu0
  %1099 = vdwg.mxu0
  %v1100 = vmax.f32 %v1095, 0.0
  %v1101 = vld [vmem:[%s3] sm:$0xf]
  %v1102 = vld [vmem:[%s3 + $0x4] sm:$0xf]
  %v1103 = vld [vmem:[%s3 + $0x8] sm:$0xf]
  %v1104 = vld [vmem:[%s3 + $0xc] sm:$0xf]
  %v1105 = vld [vmem:[%s8] sm:$0x3f]
  %v1106 = vld [vmem:[%s7] sm:$0xf]
  %v1107 = vld [vmem:[%s7 + $0x4] sm:$0xf]
  %v1108 = vld [vmem:[%s7 + $0x8] sm:$0xf]
  %v1109 = vld [vmem:[%s7 + $0xc] sm:$0xf]
  %v1110 = vld [vmem:[%s7 + $0x10] sm:$0xf]
  %v1111 = vld [vmem:[%s7 + $0x14] sm:$0xf]
  %v1112 = vld [vmem:[%s7 + $0x18] sm:$0xf]
  %v1113 = vld [vmem:[%s7 + $0x1c] sm:$0xf]
  %v1114 = vlaneseq
  %v1115 = vshrl.u32 %v1114, 7
  %v1116 = vsub.s32 0, %v1115
  %v1117 = vrot.slane %v1105, %v1116
  %v1122 = vunpack.c.l.b16 %v1101
  %v1123 = vunpack.c.l.b16 %v1102
  %v1124 = vunpack.c.l.b16 %v1103
  %v1125 = vunpack.c.l.b16 %v1104
  %v1126 = vpack.c.b16 %v1123, %v1122
  %v1127 = vpack.c.b16 %v1125, %v1124
  %v1136 = vunpack.c.l.b16 %v1106
  %v1137 = vunpack.c.l.b16 %v1107
  %v1138 = vunpack.c.l.b16 %v1108
  %v1139 = vunpack.c.l.b16 %v1109
  %v1140 = vunpack.c.l.b16 %v1110
  %v1141 = vunpack.c.l.b16 %v1111
  %v1142 = vunpack.c.l.b16 %v1112
  %v1143 = vunpack.c.l.b16 %v1113
  %v1144 = vpack.c.b16 %v1137, %v1136
  %v1145 = vpack.c.b16 %v1139, %v1138
  %v1146 = vpack.c.b16 %v1141, %v1140
  %v1147 = vpack.c.b16 %v1143, %v1142
  %v1153 = vsel %vm106, %v1126, 0
  %v1156 = vsel %vm106, %v1127, 0
  %1158 = vmatprep.subr.bf16.mxu0 0
  %1159 = vmatpush1.bf16.msra.mxu0 %v1144
  %1160 = vmatprep.subr.bf16.mxu0 0
  %1161 = vmatpush1.bf16.msra.mxu0 %v1145
  %1162 = vmatprep.subr.bf16.mxu0 0
  %1163 = vmatpush1.bf16.msra.mxu0 %v1146
  %1164 = vmatprep.subr.bf16.mxu0 0
  %1165 = vmatpush1.bf16.msra.mxu0 %v1147
  %1166 = vmatprep.subr.bf16.mxu0 0
  %1167 = vmatpush1.bf16.msra.mxu0 0
  %1168 = vmatprep.subr.bf16.mxu0 0
  %1169 = vmatpush1.bf16.msra.mxu0 0
  %1170 = vmatprep.subr.bf16.mxu0 0
  %1171 = vmatpush1.bf16.msra.mxu0 0
  %1172 = vmatprep.subr.bf16.mxu0 0
  %1173 = vmatpush1.bf16.msra.mxu0 0
  %1174 = vmatprep.subr.bf16.mxu0 0
  %1175 = vmatpush1.bf16.msra.mxu0 0
  %1176 = vmatprep.subr.bf16.mxu0 0
  %1177 = vmatpush1.bf16.msra.mxu0 0
  %1178 = vmatprep.subr.bf16.mxu0 0
  %1179 = vmatpush1.bf16.msra.mxu0 0
  %1180 = vmatprep.subr.bf16.mxu0 0
  %1181 = vmatpush1.bf16.msra.mxu0 0
  %1182 = vmatprep.subr.bf16.mxu0 0
  %1183 = vmatpush1.bf16.msra.mxu0 0
  %1184 = vmatprep.subr.bf16.mxu0 0
  %1185 = vmatpush1.bf16.msra.mxu0 0
  %1186 = vmatprep.subr.bf16.mxu0 0
  %1187 = vmatpush1.bf16.msra.mxu0 0
  %1188 = vmatprep.subr.bf16.mxu0 0
  %1189 = vmatpush1.bf16.msra.mxu0 0
  %1190 = vmatprep.mubr.bf16.mxu0 0
  %1191 = vmatmul.mubr.bf16.gmra.mrb[0].mxu0 %v1153
  %v1192 = vpop.f32.mrb[0].mxu0
  %v1193 = vadd.f32 %v1117, %v1192
  %v1194 = vpop.f32.mrb[0].mxu0
  %v1195 = vpop.f32.mrb[0].mxu0
  %v1196 = vadd.f32 %v1117, %v1195
  %v1197 = vpop.f32.mrb[0].mxu0
  %1198 = vmatprep.mubr.bf16.mxu0 0
  %1199 = vmatmul.mubr.bf16.gmra.mrb[0].mxu0 %v1156
  %v1200 = vpop.f32.mrb[0].mxu0
  %v1201 = vadd.f32 %v1117, %v1200
  %v1202 = vpop.f32.mrb[0].mxu0
  %v1203 = vpop.f32.mrb[0].mxu0
  %v1204 = vadd.f32 %v1117, %v1203
  %v1205 = vpop.f32.mrb[0].mxu0
  %1206 = vdwg.mxu0
  %v1207 = vmax.f32 %v1193, 0.0
  %v1208 = vmax.f32 %v1196, 0.0
  %v1209 = vmax.f32 %v1201, 0.0
  %v1210 = vmax.f32 %v1204, 0.0
  %v1211 = vld [vmem:[%s7 + $0x20] sm:$0xf]
  %v1212 = vld [vmem:[%s7 + $0x24] sm:$0xf]
  %v1213 = vld [vmem:[%s7 + $0x28] sm:$0xf]
  %v1214 = vld [vmem:[%s7 + $0x2c] sm:$0xf]
  %v1215 = vpack.c.bf16 %v1208, %v1207
  %v1216 = vpack.c.bf16 %v1210, %v1209
  %v1217 = vlaneseq
  %v1218 = vshrl.u32 %v1217, 7
  %v1219 = vsub.s32 1, %v1218
  %v1220 = vrot.slane %v1105, %v1219
  %v1225 = vunpack.c.l.b16 %v1211
  %v1226 = vunpack.c.l.b16 %v1212
  %v1227 = vunpack.c.l.b16 %v1213
  %v1228 = vunpack.c.l.b16 %v1214
  %v1229 = vpack.c.b16 %v1226, %v1225
  %v1230 = vpack.c.b16 %v1228, %v1227
  %v1234 = vsel %vm188, %v1215, 0
  %v1237 = vsel %vm188, %v1216, 0
  %1239 = vmatprep.subr.bf16.mxu0 0
  %1240 = vmatpush1.bf16.msra.mxu0 %v1229
  %1241 = vmatprep.subr.bf16.mxu0 0
  %1242 = vmatpush1.bf16.msra.mxu0 %v1230
  %1243 = vmatprep.subr.bf16.mxu0 0
  %1244 = vmatpush1.bf16.msra.mxu0 0
  %1245 = vmatprep.subr.bf16.mxu0 0
  %1246 = vmatpush1.bf16.msra.mxu0 0
  %1247 = vmatprep.subr.bf16.mxu0 0
  %1248 = vmatpush1.bf16.msra.mxu0 0
  %1249 = vmatprep.subr.bf16.mxu0 0
  %1250 = vmatpush1.bf16.msra.mxu0 0
  %1251 = vmatprep.subr.bf16.mxu0 0
  %1252 = vmatpush1.bf16.msra.mxu0 0
  %1253 = vmatprep.subr.bf16.mxu0 0
  %1254 = vmatpush1.bf16.msra.mxu0 0
  %1255 = vmatprep.subr.bf16.mxu0 0
  %1256 = vmatpush1.bf16.msra.mxu0 0
  %1257 = vmatprep.subr.bf16.mxu0 0
  %1258 = vmatpush1.bf16.msra.mxu0 0
  %1259 = vmatprep.subr.bf16.mxu0 0
  %1260 = vmatpush1.bf16.msra.mxu0 0
  %1261 = vmatprep.subr.bf16.mxu0 0
  %1262 = vmatpush1.bf16.msra.mxu0 0
  %1263 = vmatprep.subr.bf16.mxu0 0
  %1264 = vmatpush1.bf16.msra.mxu0 0
  %1265 = vmatprep.subr.bf16.mxu0 0
  %1266 = vmatpush1.bf16.msra.mxu0 0
  %1267 = vmatprep.subr.bf16.mxu0 0
  %1268 = vmatpush1.bf16.msra.mxu0 0
  %1269 = vmatprep.subr.bf16.mxu0 0
  %1270 = vmatpush1.bf16.msra.mxu0 0
  %1271 = vmatprep.mubr.bf16.mxu0 0
  %1272 = vmatmul.mubr.bf16.gmra.mrb[0].mxu0 %v1234
  %v1273 = vpop.f32.mrb[0].mxu0
  %v1274 = vadd.f32 %v1220, %v1273
  %v1275 = vpop.f32.mrb[0].mxu0
  %v1276 = vpop.f32.mrb[0].mxu0
  %v1277 = vadd.f32 %v1220, %v1276
  %v1278 = vpop.f32.mrb[0].mxu0
  %1279 = vmatprep.mubr.bf16.mxu0 0
  %1280 = vmatmul.mubr.bf16.gmra.mrb[0].mxu0 %v1237
  %v1281 = vpop.f32.mrb[0].mxu0
  %v1282 = vadd.f32 %v1220, %v1281
  %v1283 = vpop.f32.mrb[0].mxu0
  %v1284 = vpop.f32.mrb[0].mxu0
  %v1285 = vadd.f32 %v1220, %v1284
  %v1286 = vpop.f32.mrb[0].mxu0
  %1287 = vdwg.mxu0
  %v1288 = vmax.f32 %v1274, 0.0
  %v1289 = vmax.f32 %v1277, 0.0
  %v1290 = vmax.f32 %v1282, 0.0
  %v1291 = vmax.f32 %v1285, 0.0
  %v1294 = vunpack.c.l.s4 1966171168
  %v1295 = vunpack.c.0.s8 %v1294
  %v1296 = vlaneseq
  %v1297 = vshrl.u32 %v1296, 7
  %v1298 = vsub.s32 %v1295, %v1297
  %v1299 = vrot.slane %v54, %v1298
  %v1300 = vcombine.high %v1299, %v1299
  %v1302 = vunpack.c.l.s4 1966171168
  %v1303 = vunpack.c.0.s8 %v1302
  %v1304 = vlaneseq
  %v1305 = vshrl.u32 %v1304, 7
  %v1306 = vsub.s32 %v1303, %v1305
  %v1307 = vrot.slane %v1299, %v1306
  %v1309 = vunpack.c.l.s4 1966171168
  %v1310 = vunpack.c.0.s8 %v1309
  %v1311 = vlaneseq
  %v1312 = vshrl.u32 %v1311, 7
  %v1313 = vsub.s32 %v1310, %v1312
  %v1314 = vrot.slane %v1300, %v1313
  %v1315 = vcombine.high %v1307, %v1307
  %v1316 = vcombine.high %v1314, %v1314
  %v1317 = vlaneseq
  %v1318 = vshrl.u32 %v1317, 7
  %v1319 = vsub.s32 0, %v1318
  %v1320 = vrot.slane %v1307, %v1319
  %v1321 = vlaneseq
  %v1322 = vshrl.u32 %v1321, 7
  %v1323 = vsub.s32 0, %v1322
  %v1324 = vrot.slane %v1314, %v1323
  %v1325 = vlaneseq
  %v1326 = vshrl.u32 %v1325, 7
  %v1327 = vsub.s32 0, %v1326
  %v1328 = vrot.slane %v1315, %v1327
  %v1329 = vlaneseq
  %v1330 = vshrl.u32 %v1329, 7
  %v1331 = vsub.s32 0, %v1330
  %v1332 = vrot.slane %v1316, %v1331
  %1333 = vrot.lane.b32.xlu0 %v1320, 32
  %v1334 = vpop.permute.xlu0 %1333
  %1335 = vrot.lane.b32.xlu0 %v1324, 32
  %v1336 = vpop.permute.xlu0 %1335
  %1337 = vrot.lane.b32.xlu0 %v1328, 32
  %v1338 = vpop.permute.xlu0 %1337
  %1339 = vrot.lane.b32.xlu0 %v1332, 32
  %v1340 = vpop.permute.xlu0 %1339
  %v1345 = vsel %vm188, %v1288, %v1334
  %v1346 = vsel %vm188, %v1289, %v1336
  %v1347 = vsel %vm188, %v1290, %v1338
  %v1348 = vsel %vm188, %v1291, %v1340
  %v1349 = vld [vmem:[%s7 + $0x30] sm:$0xf]
  %v1350 = vld [vmem:[%s7 + $0x34] sm:$0xf]
  %v1351 = vld [vmem:[%s7 + $0x38] sm:$0xf]
  %v1352 = vld [vmem:[%s7 + $0x3c] sm:$0xf]
  %v1353 = vld [vmem:[%s7 + $0x40] sm:$0xf]
  %v1354 = vld [vmem:[%s7 + $0x44] sm:$0xf]
  %v1355 = vld [vmem:[%s7 + $0x48] sm:$0xf]
  %v1356 = vld [vmem:[%s7 + $0x4c] sm:$0xf]
  %v1357 = vpack.c.bf16 %v1346, %v1345
  %v1358 = vpack.c.bf16 %v1348, %v1347
  %v1359 = vlaneseq
  %v1360 = vshrl.u32 %v1359, 7
  %v1361 = vsub.s32 2, %v1360
  %v1362 = vrot.slane %v1105, %v1361
  %v1371 = vunpack.c.l.b16 %v1349
  %v1372 = vunpack.c.l.b16 %v1350
  %v1373 = vunpack.c.l.b16 %v1351
  %v1374 = vunpack.c.l.b16 %v1352
  %v1375 = vunpack.c.l.b16 %v1353
  %v1376 = vunpack.c.l.b16 %v1354
  %v1377 = vunpack.c.l.b16 %v1355
  %v1378 = vunpack.c.l.b16 %v1356
  %v1379 = vpack.c.b16 %v1372, %v1371
  %v1380 = vpack.c.b16 %v1374, %v1373
  %v1381 = vpack.c.b16 %v1376, %v1375
  %v1382 = vpack.c.b16 %v1378, %v1377
  %v1388 = vsel %vm106, %v1357, 0
  %v1391 = vsel %vm106, %v1358, 0
  %1393 = vmatprep.subr.bf16.mxu0 0
  %1394 = vmatpush1.bf16.msra.mxu0 %v1379
  %1395 = vmatprep.subr.bf16.mxu0 0
  %1396 = vmatpush1.bf16.msra.mxu0 %v1380
  %1397 = vmatprep.subr.bf16.mxu0 0
  %1398 = vmatpush1.bf16.msra.mxu0 %v1381
  %1399 = vmatprep.subr.bf16.mxu0 0
  %1400 = vmatpush1.bf16.msra.mxu0 %v1382
  %1401 = vmatprep.subr.bf16.mxu0 0
  %1402 = vmatpush1.bf16.msra.mxu0 0
  %1403 = vmatprep.subr.bf16.mxu0 0
  %1404 = vmatpush1.bf16.msra.mxu0 0
  %1405 = vmatprep.subr.bf16.mxu0 0
  %1406 = vmatpush1.bf16.msra.mxu0 0
  %1407 = vmatprep.subr.bf16.mxu0 0
  %1408 = vmatpush1.bf16.msra.mxu0 0
  %1409 = vmatprep.subr.bf16.mxu0 0
  %1410 = vmatpush1.bf16.msra.mxu0 0
  %1411 = vmatprep.subr.bf16.mxu0 0
  %1412 = vmatpush1.bf16.msra.mxu0 0
  %1413 = vmatprep.subr.bf16.mxu0 0
  %1414 = vmatpush1.bf16.msra.mxu0 0
  %1415 = vmatprep.subr.bf16.mxu0 0
  %1416 = vmatpush1.bf16.msra.mxu0 0
  %1417 = vmatprep.subr.bf16.mxu0 0
  %1418 = vmatpush1.bf16.msra.mxu0 0
  %1419 = vmatprep.subr.bf16.mxu0 0
  %1420 = vmatpush1.bf16.msra.mxu0 0
  %1421 = vmatprep.subr.bf16.mxu0 0
  %1422 = vmatpush1.bf16.msra.mxu0 0
  %1423 = vmatprep.subr.bf16.mxu0 0
  %1424 = vmatpush1.bf16.msra.mxu0 0
  %1425 = vmatprep.mubr.bf16.mxu0 0
  %1426 = vmatmul.mubr.bf16.gmra.mrb[0].mxu0 %v1388
  %v1427 = vpop.f32.mrb[0].mxu0
  %v1428 = vadd.f32 %v1362, %v1427
  %v1429 = vpop.f32.mrb[0].mxu0
  %v1430 = vpop.f32.mrb[0].mxu0
  %v1431 = vadd.f32 %v1362, %v1430
  %v1432 = vpop.f32.mrb[0].mxu0
  %1433 = vmatprep.mubr.bf16.mxu0 0
  %1434 = vmatmul.mubr.bf16.gmra.mrb[0].mxu0 %v1391
  %v1435 = vpop.f32.mrb[0].mxu0
  %v1436 = vadd.f32 %v1362, %v1435
  %v1437 = vpop.f32.mrb[0].mxu0
  %v1438 = vpop.f32.mrb[0].mxu0
  %v1439 = vadd.f32 %v1362, %v1438
  %v1440 = vpop.f32.mrb[0].mxu0
  %1441 = vdwg.mxu0
  %v1442 = vmax.f32 %v1428, 0.0
  %v1443 = vmax.f32 %v1431, 0.0
  %v1444 = vmax.f32 %v1436, 0.0
  %v1445 = vmax.f32 %v1439, 0.0
  %v1446 = vld [vmem:[%s7 + $0x50] sm:$0xf]
  %v1447 = vld [vmem:[%s7 + $0x54] sm:$0xf]
  %v1448 = vld [vmem:[%s7 + $0x58] sm:$0xf]
  %v1449 = vld [vmem:[%s7 + $0x5c] sm:$0xf]
  %v1450 = vpack.c.bf16 %v1443, %v1442
  %v1451 = vpack.c.bf16 %v1445, %v1444
  %v1452 = vlaneseq
  %v1453 = vshrl.u32 %v1452, 7
  %v1454 = vsub.s32 3, %v1453
  %v1455 = vrot.slane %v1105, %v1454
  %v1460 = vunpack.c.l.b16 %v1446
  %v1461 = vunpack.c.l.b16 %v1447
  %v1462 = vunpack.c.l.b16 %v1448
  %v1463 = vunpack.c.l.b16 %v1449
  %v1464 = vpack.c.b16 %v1461, %v1460
  %v1465 = vpack.c.b16 %v1463, %v1462
  %v1469 = vsel %vm188, %v1450, 0
  %v1472 = vsel %vm188, %v1451, 0
  %1474 = vmatprep.subr.bf16.mxu0 0
  %1475 = vmatpush1.bf16.msra.mxu0 %v1464
  %1476 = vmatprep.subr.bf16.mxu0 0
  %1477 = vmatpush1.bf16.msra.mxu0 %v1465
  %1478 = vmatprep.subr.bf16.mxu0 0
  %1479 = vmatpush1.bf16.msra.mxu0 0
  %1480 = vmatprep.subr.bf16.mxu0 0
  %1481 = vmatpush1.bf16.msra.mxu0 0
  %1482 = vmatprep.subr.bf16.mxu0 0
  %1483 = vmatpush1.bf16.msra.mxu0 0
  %1484 = vmatprep.subr.bf16.mxu0 0
  %1485 = vmatpush1.bf16.msra.mxu0 0
  %1486 = vmatprep.subr.bf16.mxu0 0
  %1487 = vmatpush1.bf16.msra.mxu0 0
  %1488 = vmatprep.subr.bf16.mxu0 0
  %1489 = vmatpush1.bf16.msra.mxu0 0
  %1490 = vmatprep.subr.bf16.mxu0 0
  %1491 = vmatpush1.bf16.msra.mxu0 0
  %1492 = vmatprep.subr.bf16.mxu0 0
  %1493 = vmatpush1.bf16.msra.mxu0 0
  %1494 = vmatprep.subr.bf16.mxu0 0
  %1495 = vmatpush1.bf16.msra.mxu0 0
  %1496 = vmatprep.subr.bf16.mxu0 0
  %1497 = vmatpush1.bf16.msra.mxu0 0
  %1498 = vmatprep.subr.bf16.mxu0 0
  %1499 = vmatpush1.bf16.msra.mxu0 0
  %1500 = vmatprep.subr.bf16.mxu0 0
  %1501 = vmatpush1.bf16.msra.mxu0 0
  %1502 = vmatprep.subr.bf16.mxu0 0
  %1503 = vmatpush1.bf16.msra.mxu0 0
  %1504 = vmatprep.subr.bf16.mxu0 0
  %1505 = vmatpush1.bf16.msra.mxu0 0
  %1506 = vmatprep.mubr.bf16.mxu0 0
  %1507 = vmatmul.mubr.bf16.gmra.mrb[0].mxu0 %v1469
  %v1508 = vpop.f32.mrb[0].mxu0
  %v1509 = vadd.f32 %v1455, %v1508
  %v1510 = vpop.f32.mrb[0].mxu0
  %v1511 = vpop.f32.mrb[0].mxu0
  %v1512 = vadd.f32 %v1455, %v1511
  %v1513 = vpop.f32.mrb[0].mxu0
  %1514 = vmatprep.mubr.bf16.mxu0 0
  %1515 = vmatmul.mubr.bf16.gmra.mrb[0].mxu0 %v1472
  %v1516 = vpop.f32.mrb[0].mxu0
  %v1517 = vadd.f32 %v1455, %v1516
  %v1518 = vpop.f32.mrb[0].mxu0
  %v1519 = vpop.f32.mrb[0].mxu0
  %v1520 = vadd.f32 %v1455, %v1519
  %v1521 = vpop.f32.mrb[0].mxu0
  %1522 = vdwg.mxu0
  %v1523 = vmax.f32 %v1509, 0.0
  %v1524 = vmax.f32 %v1512, 0.0
  %v1525 = vmax.f32 %v1517, 0.0
  %v1526 = vmax.f32 %v1520, 0.0
  %v1527 = vlaneseq
  %v1528 = vshrl.u32 %v1527, 7
  %v1529 = vsub.s32 5, %v1528
  %v1530 = vrot.slane %v1105, %v1529
  %v1531 = vmul.f32 %v1523, %v1530
  %v1532 = vmul.f32 %v1524, %v1530
  %v1533 = vmul.f32 %v1525, %v1530
  %v1534 = vmul.f32 %v1526, %v1530
  %v1535 = vsel %vm188, %v1531, 0.0
  %1536 = vadd.xlane.f32.xlu0 %v1535
  %v1537 = vpop.xlane.xlu0 %1536
  %v1538 = vsel %vm188, %v1532, 0.0
  %1539 = vadd.xlane.f32.xlu0 %v1538
  %v1540 = vpop.xlane.xlu0 %1539
  %v1541 = vsel %vm188, %v1533, 0.0
  %1542 = vadd.xlane.f32.xlu0 %v1541
  %v1543 = vpop.xlane.xlu0 %1542
  %v1544 = vsel %vm188, %v1534, 0.0
  %1545 = vadd.xlane.f32.xlu0 %v1544
  %v1546 = vpop.xlane.xlu0 %1545
  %v1547 = vrot.slane %v1537, 4
  %v1548 = vmax.f32 %v1537, %v1547
  %v1549 = vrot.slane %v1548, 2
  %v1550 = vmax.f32 %v1548, %v1549
  %v1551 = vrot.slane %v1550, 1
  %v1552 = vmax.f32 %v1550, %v1551
  %v1553 = vrot.slane %v1540, 4
  %v1554 = vmax.f32 %v1540, %v1553
  %v1555 = vrot.slane %v1554, 2
  %v1556 = vmax.f32 %v1554, %v1555
  %v1557 = vrot.slane %v1556, 1
  %v1558 = vmax.f32 %v1556, %v1557
  %v1559 = vrot.slane %v1543, 4
  %v1560 = vmax.f32 %v1543, %v1559
  %v1561 = vrot.slane %v1560, 2
  %v1562 = vmax.f32 %v1560, %v1561
  %v1563 = vrot.slane %v1562, 1
  %v1564 = vmax.f32 %v1562, %v1563
  %v1565 = vrot.slane %v1546, 4
  %v1566 = vmax.f32 %v1546, %v1565
  %v1567 = vrot.slane %v1566, 2
  %v1568 = vmax.f32 %v1566, %v1567
  %v1569 = vrot.slane %v1568, 1
  %v1570 = vmax.f32 %v1568, %v1569
  %v1571 = vsub.f32 %v1537, %v1552
  %v1572 = vsub.f32 %v1540, %v1558
  %v1573 = vsub.f32 %v1543, %v1564
  %v1574 = vsub.f32 %v1546, %v1570
  %v1575 = vmul.f32 %v1571, 1.442695
  %v1576 = vpow.pop %v1575
  %v1577 = vmul.f32 %v1572, 1.442695
  %v1578 = vpow.pop %v1577
  %v1579 = vmul.f32 %v1573, 1.442695
  %v1580 = vpow.pop %v1579
  %v1581 = vmul.f32 %v1574, 1.442695
  %v1582 = vpow.pop %v1581
  %v1583 = vrot.slane %v1576, 4
  %v1584 = vadd.f32 %v1576, %v1583
  %v1585 = vrot.slane %v1584, 2
  %v1586 = vadd.f32 %v1584, %v1585
  %v1587 = vrot.slane %v1586, 1
  %v1588 = vadd.f32 %v1586, %v1587
  %v1589 = vrot.slane %v1578, 4
  %v1590 = vadd.f32 %v1578, %v1589
  %v1591 = vrot.slane %v1590, 2
  %v1592 = vadd.f32 %v1590, %v1591
  %v1593 = vrot.slane %v1592, 1
  %v1594 = vadd.f32 %v1592, %v1593
  %v1595 = vrot.slane %v1580, 4
  %v1596 = vadd.f32 %v1580, %v1595
  %v1597 = vrot.slane %v1596, 2
  %v1598 = vadd.f32 %v1596, %v1597
  %v1599 = vrot.slane %v1598, 1
  %v1600 = vadd.f32 %v1598, %v1599
  %v1601 = vrot.slane %v1582, 4
  %v1602 = vadd.f32 %v1582, %v1601
  %v1603 = vrot.slane %v1602, 2
  %v1604 = vadd.f32 %v1602, %v1603
  %v1605 = vrot.slane %v1604, 1
  %v1606 = vadd.f32 %v1604, %v1605
  %v1607 = vrcp.pop %v1588
  %v1608 = vrcp.pop %v1594
  %v1609 = vrcp.pop %v1600
  %v1610 = vrcp.pop %v1606
  %v1611 = vmul.f32 %v1576, %v1607
  %v1612 = vmul.f32 %v1578, %v1608
  %v1613 = vmul.f32 %v1580, %v1609
  %v1614 = vmul.f32 %v1582, %v1610
  %v1615 = vmul.f32 %v1288, %v1611
  %v1616 = vmul.f32 %v1289, %v1612
  %v1617 = vmul.f32 %v1290, %v1613
  %v1618 = vmul.f32 %v1291, %v1614
  %v1619 = vsel %vm188, %v1615, 0.0
  %v1620 = vrot.slane %v1619, 4
  %v1621 = vadd.f32 %v1619, %v1620
  %v1622 = vrot.slane %v1621, 2
  %v1623 = vadd.f32 %v1621, %v1622
  %v1624 = vrot.slane %v1623, 1
  %v1625 = vadd.f32 %v1623, %v1624
  %v1626 = vsel %vm188, %v1616, 0.0
  %v1627 = vrot.slane %v1626, 4
  %v1628 = vadd.f32 %v1626, %v1627
  %v1629 = vrot.slane %v1628, 2
  %v1630 = vadd.f32 %v1628, %v1629
  %v1631 = vrot.slane %v1630, 1
  %v1632 = vadd.f32 %v1630, %v1631
  %v1633 = vsel %vm188, %v1617, 0.0
  %v1634 = vrot.slane %v1633, 4
  %v1635 = vadd.f32 %v1633, %v1634
  %v1636 = vrot.slane %v1635, 2
  %v1637 = vadd.f32 %v1635, %v1636
  %v1638 = vrot.slane %v1637, 1
  %v1639 = vadd.f32 %v1637, %v1638
  %v1640 = vsel %vm188, %v1618, 0.0
  %v1641 = vrot.slane %v1640, 4
  %v1642 = vadd.f32 %v1640, %v1641
  %v1643 = vrot.slane %v1642, 2
  %v1644 = vadd.f32 %v1642, %v1643
  %v1645 = vrot.slane %v1644, 1
  %v1646 = vadd.f32 %v1644, %v1645
  %v1651 = vsel %vm607, %v1632, %v1625
  %v1652 = vsel %vm609, %v1639, %v1651
  %v1653 = vsel %vm611, %v1646, %v1652
  %1654 = vrot.lane.b32.xlu0 %v1653, 32
  %v1655 = vpop.permute.xlu0 %1654
  %v1657 = vsel %vm188, %v54, %v1655
  %v1658 = vld [vmem:[%s7 + $0x60] sm:$0xf]
  %v1659 = vld [vmem:[%s7 + $0x64] sm:$0xf]
  %v1660 = vld [vmem:[%s7 + $0x68] sm:$0xf]
  %v1661 = vld [vmem:[%s7 + $0x6c] sm:$0xf]
  %v1662 = vld [vmem:[%s7 + $0x70] sm:$0xf]
  %v1663 = vld [vmem:[%s7 + $0x74] sm:$0xf]
  %v1664 = vld [vmem:[%s7 + $0x78] sm:$0xf]
  %v1665 = vld [vmem:[%s7 + $0x7c] sm:$0xf]
  %v1666 = vpack.c.bf16 %v1657, %v1657
  %v1667 = vlaneseq
  %v1668 = vshrl.u32 %v1667, 7
  %v1669 = vsub.s32 4, %v1668
  %v1670 = vrot.slane %v1105, %v1669
  %v1679 = vunpack.c.l.b16 %v1658
  %v1680 = vunpack.c.l.b16 %v1659
  %v1681 = vunpack.c.l.b16 %v1660
  %v1682 = vunpack.c.l.b16 %v1661
  %v1683 = vunpack.c.l.b16 %v1662
  %v1684 = vunpack.c.l.b16 %v1663
  %v1685 = vunpack.c.l.b16 %v1664
  %v1686 = vunpack.c.l.b16 %v1665
  %v1687 = vpack.c.b16 %v1680, %v1679
  %v1688 = vpack.c.b16 %v1682, %v1681
  %v1689 = vpack.c.b16 %v1684, %v1683
  %v1690 = vpack.c.b16 %v1686, %v1685
  %v1696 = vsel %vm106, %v1666, 0
  %1698 = vmatprep.subr.bf16.mxu0 0
  %1699 = vmatpush1.bf16.msra.mxu0 %v1687
  %1700 = vmatprep.subr.bf16.mxu0 0
  %1701 = vmatpush1.bf16.msra.mxu0 %v1688
  %1702 = vmatprep.subr.bf16.mxu0 0
  %1703 = vmatpush1.bf16.msra.mxu0 %v1689
  %1704 = vmatprep.subr.bf16.mxu0 0
  %1705 = vmatpush1.bf16.msra.mxu0 %v1690
  %1706 = vmatprep.subr.bf16.mxu0 0
  %1707 = vmatpush1.bf16.msra.mxu0 0
  %1708 = vmatprep.subr.bf16.mxu0 0
  %1709 = vmatpush1.bf16.msra.mxu0 0
  %1710 = vmatprep.subr.bf16.mxu0 0
  %1711 = vmatpush1.bf16.msra.mxu0 0
  %1712 = vmatprep.subr.bf16.mxu0 0
  %1713 = vmatpush1.bf16.msra.mxu0 0
  %1714 = vmatprep.subr.bf16.mxu0 0
  %1715 = vmatpush1.bf16.msra.mxu0 0
  %1716 = vmatprep.subr.bf16.mxu0 0
  %1717 = vmatpush1.bf16.msra.mxu0 0
  %1718 = vmatprep.subr.bf16.mxu0 0
  %1719 = vmatpush1.bf16.msra.mxu0 0
  %1720 = vmatprep.subr.bf16.mxu0 0
  %1721 = vmatpush1.bf16.msra.mxu0 0
  %1722 = vmatprep.subr.bf16.mxu0 0
  %1723 = vmatpush1.bf16.msra.mxu0 0
  %1724 = vmatprep.subr.bf16.mxu0 0
  %1725 = vmatpush1.bf16.msra.mxu0 0
  %1726 = vmatprep.subr.bf16.mxu0 0
  %1727 = vmatpush1.bf16.msra.mxu0 0
  %1728 = vmatprep.subr.bf16.mxu0 0
  %1729 = vmatpush1.bf16.msra.mxu0 0
  %1730 = vmatprep.mubr.bf16.mxu0 0
  %1731 = vmatmul.mubr.bf16.gmra.mrb[0].mxu0 %v1696
  %v1732 = vpop.f32.mrb[0].mxu0
  %v1733 = vadd.f32 %v1670, %v1732
  %v1734 = vpop.f32.mrb[0].mxu0
  %v1735 = vpop.f32.mrb[0].mxu0
  %v1736 = vpop.f32.mrb[0].mxu0
  %1737 = vdwg.mxu0
  %v1738 = vmax.f32 %v1733, 0.0
  %v1739 = vld [vmem:[%s12] sm:$0xff]
  %v1740 = vld [vmem:[%s12 + $0x8] sm:$0xf]
  %v1741 = vld [vmem:[%s14] sm:$0x1f]
  %1743 = vrot.lane.b32.xlu0 %v1100, 32
  %v1744 = vpop.permute.xlu0 %1743
  %v1746 = vsel %vm188, %v697, %v1744
  %v1747 = vld [vmem:[%s11] sm:$0xf]
  %v1748 = vld [vmem:[%s11 + $0x4] sm:$0xf]
  %v1749 = vld [vmem:[%s11 + $0x8] sm:$0xf]
  %v1750 = vld [vmem:[%s11 + $0xc] sm:$0xf]
  %v1751 = vld [vmem:[%s11 + $0x10] sm:$0xf]
  %v1752 = vld [vmem:[%s11 + $0x14] sm:$0xf]
  %v1753 = vld [vmem:[%s11 + $0x18] sm:$0xf]
  %v1754 = vld [vmem:[%s11 + $0x1c] sm:$0xf]
  %v1755 = vpack.c.bf16 %v1746, %v1746
  %v1756 = vlaneseq
  %v1757 = vshrl.u32 %v1756, 7
  %v1758 = vsub.s32 0, %v1757
  %v1759 = vrot.slane %v1739, %v1758
  %v1768 = vunpack.c.l.b16 %v1747
  %v1769 = vunpack.c.l.b16 %v1748
  %v1770 = vunpack.c.l.b16 %v1749
  %v1771 = vunpack.c.l.b16 %v1750
  %v1772 = vunpack.c.l.b16 %v1751
  %v1773 = vunpack.c.l.b16 %v1752
  %v1774 = vunpack.c.l.b16 %v1753
  %v1775 = vunpack.c.l.b16 %v1754
  %v1776 = vpack.c.b16 %v1769, %v1768
  %v1777 = vpack.c.b16 %v1771, %v1770
  %v1778 = vpack.c.b16 %v1773, %v1772
  %v1779 = vpack.c.b16 %v1775, %v1774
  %v1785 = vsel %vm106, %v1755, 0
  %1787 = vmatprep.subr.bf16.mxu0 0
  %1788 = vmatpush1.bf16.msra.mxu0 %v1776
  %1789 = vmatprep.subr.bf16.mxu0 0
  %1790 = vmatpush1.bf16.msra.mxu0 %v1777
  %1791 = vmatprep.subr.bf16.mxu0 0
  %1792 = vmatpush1.bf16.msra.mxu0 %v1778
  %1793 = vmatprep.subr.bf16.mxu0 0
  %1794 = vmatpush1.bf16.msra.mxu0 %v1779
  %1795 = vmatprep.subr.bf16.mxu0 0
  %1796 = vmatpush1.bf16.msra.mxu0 0
  %1797 = vmatprep.subr.bf16.mxu0 0
  %1798 = vmatpush1.bf16.msra.mxu0 0
  %1799 = vmatprep.subr.bf16.mxu0 0
  %1800 = vmatpush1.bf16.msra.mxu0 0
  %1801 = vmatprep.subr.bf16.mxu0 0
  %1802 = vmatpush1.bf16.msra.mxu0 0
  %1803 = vmatprep.subr.bf16.mxu0 0
  %1804 = vmatpush1.bf16.msra.mxu0 0
  %1805 = vmatprep.subr.bf16.mxu0 0
  %1806 = vmatpush1.bf16.msra.mxu0 0
  %1807 = vmatprep.subr.bf16.mxu0 0
  %1808 = vmatpush1.bf16.msra.mxu0 0
  %1809 = vmatprep.subr.bf16.mxu0 0
  %1810 = vmatpush1.bf16.msra.mxu0 0
  %1811 = vmatprep.subr.bf16.mxu0 0
  %1812 = vmatpush1.bf16.msra.mxu0 0
  %1813 = vmatprep.subr.bf16.mxu0 0
  %1814 = vmatpush1.bf16.msra.mxu0 0
  %1815 = vmatprep.subr.bf16.mxu0 0
  %1816 = vmatpush1.bf16.msra.mxu0 0
  %1817 = vmatprep.subr.bf16.mxu0 0
  %1818 = vmatpush1.bf16.msra.mxu0 0
  %1819 = vmatprep.mubr.bf16.mxu0 0
  %1820 = vmatmul.mubr.bf16.gmra.mrb[0].mxu0 %v1785
  %v1821 = vpop.f32.mrb[0].mxu0
  %v1822 = vadd.f32 %v1759, %v1821
  %v1823 = vpop.f32.mrb[0].mxu0
  %v1824 = vpop.f32.mrb[0].mxu0
  %v1825 = vpop.f32.mrb[0].mxu0
  %1826 = vdwg.mxu0
  %v1827 = vmax.f32 %v1822, 0.0
  %v1828 = vld [vmem:[%s11 + $0x20] sm:$0xf]
  %v1829 = vld [vmem:[%s11 + $0x24] sm:$0xf]
  %v1830 = vld [vmem:[%s11 + $0x28] sm:$0xf]
  %v1831 = vld [vmem:[%s11 + $0x2c] sm:$0xf]
  %v1832 = vpack.c.bf16 %v1827, %v1827
  %v1833 = vlaneseq
  %v1834 = vshrl.u32 %v1833, 7
  %v1835 = vsub.s32 1, %v1834
  %v1836 = vrot.slane %v1739, %v1835
  %v1841 = vunpack.c.l.b16 %v1828
  %v1842 = vunpack.c.l.b16 %v1829
  %v1843 = vunpack.c.l.b16 %v1830
  %v1844 = vunpack.c.l.b16 %v1831
  %v1845 = vpack.c.b16 %v1842, %v1841
  %v1846 = vpack.c.b16 %v1844, %v1843
  %v1850 = vsel %vm188, %v1832, 0
  %1852 = vmatprep.subr.bf16.mxu0 0
  %1853 = vmatpush1.bf16.msra.mxu0 %v1845
  %1854 = vmatprep.subr.bf16.mxu0 0
  %1855 = vmatpush1.bf16.msra.mxu0 %v1846
  %1856 = vmatprep.subr.bf16.mxu0 0
  %1857 = vmatpush1.bf16.msra.mxu0 0
  %1858 = vmatprep.subr.bf16.mxu0 0
  %1859 = vmatpush1.bf16.msra.mxu0 0
  %1860 = vmatprep.subr.bf16.mxu0 0
  %1861 = vmatpush1.bf16.msra.mxu0 0
  %1862 = vmatprep.subr.bf16.mxu0 0
  %1863 = vmatpush1.bf16.msra.mxu0 0
  %1864 = vmatprep.subr.bf16.mxu0 0
  %1865 = vmatpush1.bf16.msra.mxu0 0
  %1866 = vmatprep.subr.bf16.mxu0 0
  %1867 = vmatpush1.bf16.msra.mxu0 0
  %1868 = vmatprep.subr.bf16.mxu0 0
  %1869 = vmatpush1.bf16.msra.mxu0 0
  %1870 = vmatprep.subr.bf16.mxu0 0
  %1871 = vmatpush1.bf16.msra.mxu0 0
  %1872 = vmatprep.subr.bf16.mxu0 0
  %1873 = vmatpush1.bf16.msra.mxu0 0
  %1874 = vmatprep.subr.bf16.mxu0 0
  %1875 = vmatpush1.bf16.msra.mxu0 0
  %1876 = vmatprep.subr.bf16.mxu0 0
  %1877 = vmatpush1.bf16.msra.mxu0 0
  %1878 = vmatprep.subr.bf16.mxu0 0
  %1879 = vmatpush1.bf16.msra.mxu0 0
  %1880 = vmatprep.subr.bf16.mxu0 0
  %1881 = vmatpush1.bf16.msra.mxu0 0
  %1882 = vmatprep.subr.bf16.mxu0 0
  %1883 = vmatpush1.bf16.msra.mxu0 0
  %1884 = vmatprep.mubr.bf16.mxu0 0
  %1885 = vmatmul.mubr.bf16.gmra.mrb[0].mxu0 %v1850
  %v1886 = vpop.f32.mrb[0].mxu0
  %v1887 = vadd.f32 %v1836, %v1886
  %v1888 = vpop.f32.mrb[0].mxu0
  %v1889 = vpop.f32.mrb[0].mxu0
  %v1890 = vpop.f32.mrb[0].mxu0
  %1891 = vdwg.mxu0
  %v1892 = vlaneseq
  %v1893 = vshrl.u32 %v1892, 7
  %v1894 = vsub.s32 6, %v1893
  %v1895 = vrot.slane %v1739, %v1894
  %v1896 = vmul.f32 %v1887, %v1895
  %v1897 = vlaneseq
  %v1898 = vshrl.u32 %v1897, 7
  %v1899 = vsub.s32 7, %v1898
  %v1900 = vrot.slane %v1739, %v1899
  %v1901 = vadd.f32 %v1896, %v1900
  %v1902 = vmax.f32 %v1901, 0.0
  %v1903 = vld [vmem:[%s11 + $0x30] sm:$0xf]
  %v1904 = vld [vmem:[%s11 + $0x34] sm:$0xf]
  %v1905 = vld [vmem:[%s11 + $0x38] sm:$0xf]
  %v1906 = vld [vmem:[%s11 + $0x3c] sm:$0xf]
  %v1907 = vpack.c.bf16 %v1902, %v1902
  %v1908 = vlaneseq
  %v1909 = vshrl.u32 %v1908, 7
  %v1910 = vsub.s32 2, %v1909
  %v1911 = vrot.slane %v1739, %v1910
  %v1916 = vunpack.c.l.b16 %v1903
  %v1917 = vunpack.c.l.b16 %v1904
  %v1918 = vunpack.c.l.b16 %v1905
  %v1919 = vunpack.c.l.b16 %v1906
  %v1920 = vpack.c.b16 %v1917, %v1916
  %v1921 = vpack.c.b16 %v1919, %v1918
  %v1925 = vsel %vm188, %v1907, 0
  %1927 = vmatprep.subr.bf16.mxu0 0
  %1928 = vmatpush1.bf16.msra.mxu0 %v1920
  %1929 = vmatprep.subr.bf16.mxu0 0
  %1930 = vmatpush1.bf16.msra.mxu0 %v1921
  %1931 = vmatprep.subr.bf16.mxu0 0
  %1932 = vmatpush1.bf16.msra.mxu0 0
  %1933 = vmatprep.subr.bf16.mxu0 0
  %1934 = vmatpush1.bf16.msra.mxu0 0
  %1935 = vmatprep.subr.bf16.mxu0 0
  %1936 = vmatpush1.bf16.msra.mxu0 0
  %1937 = vmatprep.subr.bf16.mxu0 0
  %1938 = vmatpush1.bf16.msra.mxu0 0
  %1939 = vmatprep.subr.bf16.mxu0 0
  %1940 = vmatpush1.bf16.msra.mxu0 0
  %1941 = vmatprep.subr.bf16.mxu0 0
  %1942 = vmatpush1.bf16.msra.mxu0 0
  %1943 = vmatprep.subr.bf16.mxu0 0
  %1944 = vmatpush1.bf16.msra.mxu0 0
  %1945 = vmatprep.subr.bf16.mxu0 0
  %1946 = vmatpush1.bf16.msra.mxu0 0
  %1947 = vmatprep.subr.bf16.mxu0 0
  %1948 = vmatpush1.bf16.msra.mxu0 0
  %1949 = vmatprep.subr.bf16.mxu0 0
  %1950 = vmatpush1.bf16.msra.mxu0 0
  %1951 = vmatprep.subr.bf16.mxu0 0
  %1952 = vmatpush1.bf16.msra.mxu0 0
  %1953 = vmatprep.subr.bf16.mxu0 0
  %1954 = vmatpush1.bf16.msra.mxu0 0
  %1955 = vmatprep.subr.bf16.mxu0 0
  %1956 = vmatpush1.bf16.msra.mxu0 0
  %1957 = vmatprep.subr.bf16.mxu0 0
  %1958 = vmatpush1.bf16.msra.mxu0 0
  %1959 = vmatprep.mubr.bf16.mxu0 0
  %1960 = vmatmul.mubr.bf16.gmra.mrb[0].mxu0 %v1925
  %v1961 = vpop.f32.mrb[0].mxu0
  %v1962 = vadd.f32 %v1911, %v1961
  %v1963 = vpop.f32.mrb[0].mxu0
  %v1964 = vpop.f32.mrb[0].mxu0
  %v1965 = vpop.f32.mrb[0].mxu0
  %1966 = vdwg.mxu0
  %v1967 = vld [vmem:[%s11 + $0x40] sm:$0xf]
  %v1968 = vld [vmem:[%s11 + $0x44] sm:$0xf]
  %v1969 = vld [vmem:[%s11 + $0x48] sm:$0xf]
  %v1970 = vld [vmem:[%s11 + $0x4c] sm:$0xf]
  %v1971 = vpack.c.bf16 %v1738, %v1738
  %v1972 = vlaneseq
  %v1973 = vshrl.u32 %v1972, 7
  %v1974 = vsub.s32 3, %v1973
  %v1975 = vrot.slane %v1739, %v1974
  %v1980 = vunpack.c.l.b16 %v1967
  %v1981 = vunpack.c.l.b16 %v1968
  %v1982 = vunpack.c.l.b16 %v1969
  %v1983 = vunpack.c.l.b16 %v1970
  %v1984 = vpack.c.b16 %v1981, %v1980
  %v1985 = vpack.c.b16 %v1983, %v1982
  %v1989 = vsel %vm188, %v1971, 0
  %1991 = vmatprep.subr.bf16.mxu0 0
  %1992 = vmatpush1.bf16.msra.mxu0 %v1984
  %1993 = vmatprep.subr.bf16.mxu0 0
  %1994 = vmatpush1.bf16.msra.mxu0 %v1985
  %1995 = vmatprep.subr.bf16.mxu0 0
  %1996 = vmatpush1.bf16.msra.mxu0 0
  %1997 = vmatprep.subr.bf16.mxu0 0
  %1998 = vmatpush1.bf16.msra.mxu0 0
  %1999 = vmatprep.subr.bf16.mxu0 0
  %2000 = vmatpush1.bf16.msra.mxu0 0
  %2001 = vmatprep.subr.bf16.mxu0 0
  %2002 = vmatpush1.bf16.msra.mxu0 0
  %2003 = vmatprep.subr.bf16.mxu0 0
  %2004 = vmatpush1.bf16.msra.mxu0 0
  %2005 = vmatprep.subr.bf16.mxu0 0
  %2006 = vmatpush1.bf16.msra.mxu0 0
  %2007 = vmatprep.subr.bf16.mxu0 0
  %2008 = vmatpush1.bf16.msra.mxu0 0
  %2009 = vmatprep.subr.bf16.mxu0 0
  %2010 = vmatpush1.bf16.msra.mxu0 0
  %2011 = vmatprep.subr.bf16.mxu0 0
  %2012 = vmatpush1.bf16.msra.mxu0 0
  %2013 = vmatprep.subr.bf16.mxu0 0
  %2014 = vmatpush1.bf16.msra.mxu0 0
  %2015 = vmatprep.subr.bf16.mxu0 0
  %2016 = vmatpush1.bf16.msra.mxu0 0
  %2017 = vmatprep.subr.bf16.mxu0 0
  %2018 = vmatpush1.bf16.msra.mxu0 0
  %2019 = vmatprep.subr.bf16.mxu0 0
  %2020 = vmatpush1.bf16.msra.mxu0 0
  %2021 = vmatprep.subr.bf16.mxu0 0
  %2022 = vmatpush1.bf16.msra.mxu0 0
  %2023 = vmatprep.mubr.bf16.mxu0 0
  %2024 = vmatmul.mubr.bf16.gmra.mrb[0].mxu0 %v1989
  %v2025 = vpop.f32.mrb[0].mxu0
  %v2026 = vadd.f32 %v1975, %v2025
  %v2027 = vpop.f32.mrb[0].mxu0
  %v2028 = vpop.f32.mrb[0].mxu0
  %v2029 = vpop.f32.mrb[0].mxu0
  %2030 = vdwg.mxu0
  %v2031 = vlaneseq
  %v2032 = vshrl.u32 %v2031, 7
  %v2033 = vsub.s32 0, %v2032
  %v2034 = vrot.slane %v1740, %v2033
  %v2035 = vmul.f32 %v2026, %v2034
  %v2036 = vlaneseq
  %v2037 = vshrl.u32 %v2036, 7
  %v2038 = vsub.s32 1, %v2037
  %v2039 = vrot.slane %v1740, %v2038
  %v2040 = vadd.f32 %v2035, %v2039
  %v2041 = vmax.f32 %v2040, 0.0
  %v2042 = vld [vmem:[%s11 + $0x50] sm:$0xf]
  %v2043 = vld [vmem:[%s11 + $0x54] sm:$0xf]
  %v2044 = vld [vmem:[%s11 + $0x58] sm:$0xf]
  %v2045 = vld [vmem:[%s11 + $0x5c] sm:$0xf]
  %v2046 = vpack.c.bf16 %v2041, %v2041
  %v2047 = vlaneseq
  %v2048 = vshrl.u32 %v2047, 7
  %v2049 = vsub.s32 4, %v2048
  %v2050 = vrot.slane %v1739, %v2049
  %v2055 = vunpack.c.l.b16 %v2042
  %v2056 = vunpack.c.l.b16 %v2043
  %v2057 = vunpack.c.l.b16 %v2044
  %v2058 = vunpack.c.l.b16 %v2045
  %v2059 = vpack.c.b16 %v2056, %v2055
  %v2060 = vpack.c.b16 %v2058, %v2057
  %v2064 = vsel %vm188, %v2046, 0
  %2066 = vmatprep.subr.bf16.mxu0 0
  %2067 = vmatpush1.bf16.msra.mxu0 %v2059
  %2068 = vmatprep.subr.bf16.mxu0 0
  %2069 = vmatpush1.bf16.msra.mxu0 %v2060
  %2070 = vmatprep.subr.bf16.mxu0 0
  %2071 = vmatpush1.bf16.msra.mxu0 0
  %2072 = vmatprep.subr.bf16.mxu0 0
  %2073 = vmatpush1.bf16.msra.mxu0 0
  %2074 = vmatprep.subr.bf16.mxu0 0
  %2075 = vmatpush1.bf16.msra.mxu0 0
  %2076 = vmatprep.subr.bf16.mxu0 0
  %2077 = vmatpush1.bf16.msra.mxu0 0
  %2078 = vmatprep.subr.bf16.mxu0 0
  %2079 = vmatpush1.bf16.msra.mxu0 0
  %2080 = vmatprep.subr.bf16.mxu0 0
  %2081 = vmatpush1.bf16.msra.mxu0 0
  %2082 = vmatprep.subr.bf16.mxu0 0
  %2083 = vmatpush1.bf16.msra.mxu0 0
  %2084 = vmatprep.subr.bf16.mxu0 0
  %2085 = vmatpush1.bf16.msra.mxu0 0
  %2086 = vmatprep.subr.bf16.mxu0 0
  %2087 = vmatpush1.bf16.msra.mxu0 0
  %2088 = vmatprep.subr.bf16.mxu0 0
  %2089 = vmatpush1.bf16.msra.mxu0 0
  %2090 = vmatprep.subr.bf16.mxu0 0
  %2091 = vmatpush1.bf16.msra.mxu0 0
  %2092 = vmatprep.subr.bf16.mxu0 0
  %2093 = vmatpush1.bf16.msra.mxu0 0
  %2094 = vmatprep.subr.bf16.mxu0 0
  %2095 = vmatpush1.bf16.msra.mxu0 0
  %2096 = vmatprep.subr.bf16.mxu0 0
  %2097 = vmatpush1.bf16.msra.mxu0 0
  %2098 = vmatprep.mubr.bf16.mxu0 0
  %2099 = vmatmul.mubr.bf16.gmra.mrb[0].mxu0 %v2064
  %v2100 = vpop.f32.mrb[0].mxu0
  %v2101 = vadd.f32 %v2050, %v2100
  %v2102 = vpop.f32.mrb[0].mxu0
  %v2103 = vpop.f32.mrb[0].mxu0
  %v2104 = vpop.f32.mrb[0].mxu0
  %2105 = vdwg.mxu0
  %2107 = vrot.lane.b32.xlu0 %v2101, 32
  %v2108 = vpop.permute.xlu0 %2107
  %v2110 = vsel %vm188, %v1962, %v2108
  %v2111 = vld [vmem:[%s11 + $0x60] sm:$0xf]
  %v2112 = vld [vmem:[%s11 + $0x64] sm:$0xf]
  %v2113 = vld [vmem:[%s11 + $0x68] sm:$0xf]
  %v2114 = vld [vmem:[%s11 + $0x6c] sm:$0xf]
  %v2115 = vld [vmem:[%s11 + $0x70] sm:$0xf]
  %v2116 = vld [vmem:[%s11 + $0x74] sm:$0xf]
  %v2117 = vld [vmem:[%s11 + $0x78] sm:$0xf]
  %v2118 = vld [vmem:[%s11 + $0x7c] sm:$0xf]
  %v2119 = vpack.c.bf16 %v2110, %v2110
  %v2120 = vlaneseq
  %v2121 = vshrl.u32 %v2120, 7
  %v2122 = vsub.s32 5, %v2121
  %v2123 = vrot.slane %v1739, %v2122
  %v2132 = vunpack.c.l.b16 %v2111
  %v2133 = vunpack.c.l.b16 %v2112
  %v2134 = vunpack.c.l.b16 %v2113
  %v2135 = vunpack.c.l.b16 %v2114
  %v2136 = vunpack.c.l.b16 %v2115
  %v2137 = vunpack.c.l.b16 %v2116
  %v2138 = vunpack.c.l.b16 %v2117
  %v2139 = vunpack.c.l.b16 %v2118
  %v2140 = vpack.c.b16 %v2133, %v2132
  %v2141 = vpack.c.b16 %v2135, %v2134
  %v2142 = vpack.c.b16 %v2137, %v2136
  %v2143 = vpack.c.b16 %v2139, %v2138
  %v2149 = vsel %vm106, %v2119, 0
  %2151 = vmatprep.subr.bf16.mxu0 0
  %2152 = vmatpush1.bf16.msra.mxu0 %v2140
  %2153 = vmatprep.subr.bf16.mxu0 0
  %2154 = vmatpush1.bf16.msra.mxu0 %v2141
  %2155 = vmatprep.subr.bf16.mxu0 0
  %2156 = vmatpush1.bf16.msra.mxu0 %v2142
  %2157 = vmatprep.subr.bf16.mxu0 0
  %2158 = vmatpush1.bf16.msra.mxu0 %v2143
  %2159 = vmatprep.subr.bf16.mxu0 0
  %2160 = vmatpush1.bf16.msra.mxu0 0
  %2161 = vmatprep.subr.bf16.mxu0 0
  %2162 = vmatpush1.bf16.msra.mxu0 0
  %2163 = vmatprep.subr.bf16.mxu0 0
  %2164 = vmatpush1.bf16.msra.mxu0 0
  %2165 = vmatprep.subr.bf16.mxu0 0
  %2166 = vmatpush1.bf16.msra.mxu0 0
  %2167 = vmatprep.subr.bf16.mxu0 0
  %2168 = vmatpush1.bf16.msra.mxu0 0
  %2169 = vmatprep.subr.bf16.mxu0 0
  %2170 = vmatpush1.bf16.msra.mxu0 0
  %2171 = vmatprep.subr.bf16.mxu0 0
  %2172 = vmatpush1.bf16.msra.mxu0 0
  %2173 = vmatprep.subr.bf16.mxu0 0
  %2174 = vmatpush1.bf16.msra.mxu0 0
  %2175 = vmatprep.subr.bf16.mxu0 0
  %2176 = vmatpush1.bf16.msra.mxu0 0
  %2177 = vmatprep.subr.bf16.mxu0 0
  %2178 = vmatpush1.bf16.msra.mxu0 0
  %2179 = vmatprep.subr.bf16.mxu0 0
  %2180 = vmatpush1.bf16.msra.mxu0 0
  %2181 = vmatprep.subr.bf16.mxu0 0
  %2182 = vmatpush1.bf16.msra.mxu0 0
  %2183 = vmatprep.mubr.bf16.mxu0 0
  %2184 = vmatmul.mubr.bf16.gmra.mrb[0].mxu0 %v2149
  %v2185 = vpop.f32.mrb[0].mxu0
  %v2186 = vadd.f32 %v2123, %v2185
  %v2187 = vpop.f32.mrb[0].mxu0
  %v2188 = vpop.f32.mrb[0].mxu0
  %v2189 = vpop.f32.mrb[0].mxu0
  %2190 = vdwg.mxu0
  %v2191 = vlaneseq
  %v2192 = vshrl.u32 %v2191, 7
  %v2193 = vsub.s32 2, %v2192
  %v2194 = vrot.slane %v1740, %v2193
  %v2195 = vmul.f32 %v2186, %v2194
  %v2196 = vlaneseq
  %v2197 = vshrl.u32 %v2196, 7
  %v2198 = vsub.s32 3, %v2197
  %v2199 = vrot.slane %v1740, %v2198
  %v2200 = vadd.f32 %v2195, %v2199
  %v2201 = vmax.f32 %v2200, 0.0
  %v2202 = vld [vmem:[%s13] sm:$0xf]
  %v2203 = vld [vmem:[%s13 + $0x4] sm:$0xf]
  %v2204 = vld [vmem:[%s13 + $0x8] sm:$0xf]
  %v2205 = vld [vmem:[%s13 + $0xc] sm:$0xf]
  %v2206 = vpack.c.bf16 %v2201, %v2201
  %v2207 = vlaneseq
  %v2208 = vshrl.u32 %v2207, 7
  %v2209 = vsub.s32 0, %v2208
  %v2210 = vrot.slane %v1741, %v2209
  %v2215 = vunpack.c.l.b16 %v2202
  %v2216 = vunpack.c.l.b16 %v2203
  %v2217 = vunpack.c.l.b16 %v2204
  %v2218 = vunpack.c.l.b16 %v2205
  %v2219 = vpack.c.b16 %v2216, %v2215
  %v2220 = vpack.c.b16 %v2218, %v2217
  %v2224 = vsel %vm188, %v2206, 0
  %2226 = vmatprep.subr.bf16.mxu0 0
  %2227 = vmatpush1.bf16.msra.mxu0 %v2219
  %2228 = vmatprep.subr.bf16.mxu0 0
  %2229 = vmatpush1.bf16.msra.mxu0 %v2220
  %2230 = vmatprep.subr.bf16.mxu0 0
  %2231 = vmatpush1.bf16.msra.mxu0 0
  %2232 = vmatprep.subr.bf16.mxu0 0
  %2233 = vmatpush1.bf16.msra.mxu0 0
  %2234 = vmatprep.subr.bf16.mxu0 0
  %2235 = vmatpush1.bf16.msra.mxu0 0
  %2236 = vmatprep.subr.bf16.mxu0 0
  %2237 = vmatpush1.bf16.msra.mxu0 0
  %2238 = vmatprep.subr.bf16.mxu0 0
  %2239 = vmatpush1.bf16.msra.mxu0 0
  %2240 = vmatprep.subr.bf16.mxu0 0
  %2241 = vmatpush1.bf16.msra.mxu0 0
  %2242 = vmatprep.subr.bf16.mxu0 0
  %2243 = vmatpush1.bf16.msra.mxu0 0
  %2244 = vmatprep.subr.bf16.mxu0 0
  %2245 = vmatpush1.bf16.msra.mxu0 0
  %2246 = vmatprep.subr.bf16.mxu0 0
  %2247 = vmatpush1.bf16.msra.mxu0 0
  %2248 = vmatprep.subr.bf16.mxu0 0
  %2249 = vmatpush1.bf16.msra.mxu0 0
  %2250 = vmatprep.subr.bf16.mxu0 0
  %2251 = vmatpush1.bf16.msra.mxu0 0
  %2252 = vmatprep.subr.bf16.mxu0 0
  %2253 = vmatpush1.bf16.msra.mxu0 0
  %2254 = vmatprep.subr.bf16.mxu0 0
  %2255 = vmatpush1.bf16.msra.mxu0 0
  %2256 = vmatprep.subr.bf16.mxu0 0
  %2257 = vmatpush1.bf16.msra.mxu0 0
  %2258 = vmatprep.mubr.bf16.mxu0 0
  %2259 = vmatmul.mubr.bf16.gmra.mrb[0].mxu0 %v2224
  %v2260 = vpop.f32.mrb[0].mxu0
  %v2261 = vadd.f32 %v2210, %v2260
  %v2262 = vpop.f32.mrb[0].mxu0
  %v2263 = vpop.f32.mrb[0].mxu0
  %v2264 = vpop.f32.mrb[0].mxu0
  %2265 = vdwg.mxu0
  %v2266 = vlaneseq
  %v2267 = vshrl.u32 %v2266, 7
  %v2268 = vsub.s32 1, %v2267
  %v2269 = vrot.slane %v1741, %v2268
  %v2270 = vmul.f32 %v2261, %v2269
  %v2271 = vlaneseq
  %v2272 = vshrl.u32 %v2271, 7
  %v2273 = vsub.s32 2, %v2272
  %v2274 = vrot.slane %v1741, %v2273
  %v2275 = vadd.f32 %v2270, %v2274
  %v2276 = vmax.f32 %v2275, 0.0
  %v2277 = vlaneseq
  %v2278 = vshrl.u32 %v2277, 7
  %v2279 = vsub.s32 3, %v2278
  %v2280 = vrot.slane %v1741, %v2279
  %v2281 = vmul.f32 %v2276, %v2280
  %vm2282 = vcmask 125952
  %v2283 = vsel %vm2282, %v2281, 0.0
  %2284 = vadd.xlane.f32.xlu0 %v2283
  %v2285 = vpop.xlane.xlu0 %2284
  %v2286 = vlaneseq
  %v2287 = vshrl.u32 %v2286, 7
  %v2288 = vsub.s32 4, %v2287
  %v2289 = vrot.slane %v1741, %v2288
  %v2290 = vadd.f32 %v2285, %v2289
  %2292 = vset.pattern.permute.xlu0 0
  %2293 = vperm.xlu0 %2292, %v2290
  %v2294 = vpop.permute.xlu0 %2293
  %2296 = vst [vmem:[%s15] sm:$0xf] %v2294
  // Predicated region
  $region62: #{model_forward.1} parent=0 // pred_check
    _
  $region63: #{model_forward.1} parent=0 // pred_check_branch
    %2298 = sbr.rel (0) target = $region65
  $region64: #{model_forward.1} parent=0 // pred_region
    _
  $region65: #{model_forward.1} parent=0 // pred_fallthru
    _
  // Predicated region
  $region66: #{model_forward.1} parent=0 // pred_check
    _
  $region67: #{model_forward.1} parent=0 // pred_check_branch
    %2300 = sbr.rel (0) target = $region69
  $region68: #{model_forward.1} parent=0 // pred_region
    _
  $region69: #{model_forward.1} parent=0 // pred_fallthru
    _

</llo_original>
